<compile_context>
chip_gen: v5e
topology: v5e:2x2
jax: 0.10.0
libtpu: 0.0.40
codegen_flags: <defaults>
</compile_context>

<pallas_src>
import functools

import jax
import jax.numpy as jnp
from jax.experimental import pallas as pl
from jax.experimental.pallas import tpu as pltpu

NEG_SLOPE = 0.2     # GATv2Conv default LeakyReLU negative slope
LN_EPS = 1e-5
ROW_TILE = 128      # target-row tile (grid axis, "parallel" across TensorCores)
HIGHEST = jax.lax.Precision.HIGHEST


# ---------------------------------------------------------------------------
# Kernel 1: fused per-head linear projections (grid over heads).
# ---------------------------------------------------------------------------
def _project_kernel(x_ref, xT_ref, wr_ref, br_ref, wlT_ref, blT_ref,
                    xr_out_ref, xlT_out_ref):
    x = x_ref[...]                          # (N, D)
    xT = xT_ref[...]                        # (D, N)
    # target-side features:  x @ Wr_h + br_h           -> (N, D)
    xr_out_ref[0] = (jnp.dot(x, wr_ref[0], precision=HIGHEST,
                             preferred_element_type=jnp.float32)
                     + br_ref[0])
    # source-side features, pre-transposed:  Wl_h^T @ x^T + bl_h  -> (D, N)
    xlT_out_ref[0] = (jnp.dot(wlT_ref[0], xT, precision=HIGHEST,
                              preferred_element_type=jnp.float32)
                      + blT_ref[0])


def _project(x, wr3, br3, wlT3, blT3):
    n, d = x.shape
    nh = wr3.shape[0]
    xT = x.T                                # wrapper-side layout plumbing (tiny)
    return pl.pallas_call(
        _project_kernel,
        grid=(nh,),
        in_specs=[
            pl.BlockSpec((n, d), lambda k: (0, 0)),          # x, resident
            pl.BlockSpec((d, n), lambda k: (0, 0)),          # x^T, resident
            pl.BlockSpec((1, d, d), lambda k: (k, 0, 0)),    # Wr_h
            pl.BlockSpec((1, 1, d), lambda k: (k, 0, 0)),    # br_h
            pl.BlockSpec((1, d, d), lambda k: (k, 0, 0)),    # Wl_h^T
            pl.BlockSpec((1, d, 1), lambda k: (k, 0, 0)),    # bl_h (column)
        ],
        out_specs=[
            pl.BlockSpec((1, n, d), lambda k: (k, 0, 0)),
            pl.BlockSpec((1, d, n), lambda k: (k, 0, 0)),
        ],
        out_shape=[
            jax.ShapeDtypeStruct((nh, n, d), jnp.float32),   # xr3
            jax.ShapeDtypeStruct((nh, d, n), jnp.float32),   # xlT3
        ],
        compiler_params=pltpu.CompilerParams(
            dimension_semantics=("parallel",)),
    )(x, xT, wr3, br3, wlT3, blT3)


# ---------------------------------------------------------------------------
# Kernel 2: GATv2 attention + mean-over-heads + LayerNorm + residual (+ReLU),
# tiled over target rows.
# ---------------------------------------------------------------------------
def _gat_attn_kernel(xlT3_ref, xr3_ref, adj_ref, xres_ref, att_ref,
                     bias_ref, gamma_ref, beta_ref, out_ref,
                     acc_scr, *, heads, apply_relu):
    mask = adj_ref[...] > 0                 # (TM, N) neighbor mask (bf16 0/1 in)
    neg_inf = jnp.float32(-1e30)
    acc_scr[...] = jnp.zeros_like(acc_scr)

    # --- per-head GATv2 score + masked softmax + aggregation ----------------
    # Lane axis of every big elementwise op is the source-node axis (N >= 128),
    # so LeakyReLU / exp / reductions are lane-dense (no D=32 lane waste).
    @pl.loop(0, heads)
    def _head(h):
        xr_h = xr3_ref[h]                   # (TM, D)  target features
        xlT_h = xlT3_ref[h]                 # (D, N)   source features (transposed)
        a_h = att_ref[h]                    # (D, 1)
        s = xr_h[:, :, None] + xlT_h[None, :, :]          # (TM, D, N)
        s = jnp.where(s > 0, s, NEG_SLOPE * s)            # LeakyReLU
        e = jnp.sum(a_h[None, :, :] * s, axis=1)          # (TM, N)
        e = jnp.where(mask, e, neg_inf)
        e = e - jnp.max(e, axis=-1, keepdims=True)
        p = jnp.exp(e)                                    # masked entries -> 0
        l = jnp.sum(p, axis=-1, keepdims=True)            # softmax denominator
        # aggregation on MXU: p (TM, N) contracted with xl_h^T (D, N) over N;
        # softmax normalization deferred to a single (TM, D) scale.
        ctx = jax.lax.dot_general(
            p, xlT_h, dimension_numbers=(((1,), (1,)), ((), ())),
            precision=HIGHEST, preferred_element_type=jnp.float32)  # (TM, D)
        acc_scr[...] += ctx * (1.0 / l)

    conv = acc_scr[...] * (1.0 / heads) + bias_ref[...]   # concat=False -> mean+bias

    # --- per-node LayerNorm + residual (+ ReLU) ------------------------------
    mu = jnp.mean(conv, axis=-1, keepdims=True)
    var = jnp.mean((conv - mu) ** 2, axis=-1, keepdims=True)
    y = (conv - mu) * jax.lax.rsqrt(var + LN_EPS)
    y = y * gamma_ref[...] + beta_ref[...] + xres_ref[...]
    if apply_relu:
        y = jnp.maximum(y, 0.0)
    out_ref[...] = y.astype(out_ref.dtype)


def _gat_attention(xlT3, xr3, adj, x, att_t, bias, gamma, beta, *,
                   apply_relu, tm):
    nh, d, n = xlT3.shape
    kernel = functools.partial(_gat_attn_kernel, heads=nh, apply_relu=apply_relu)
    return pl.pallas_call(
        kernel,
        grid=(n // tm,),
        in_specs=[
            pl.BlockSpec((nh, d, n), lambda i: (0, 0, 0)),   # source feats, resident
            pl.BlockSpec((nh, tm, d), lambda i: (0, i, 0)),  # target feats, row tile
            pl.BlockSpec((tm, n), lambda i: (i, 0)),         # adjacency rows (bf16)
            pl.BlockSpec((tm, d), lambda i: (i, 0)),         # residual rows
            pl.BlockSpec((nh, d, 1), lambda i: (0, 0, 0)),   # attention vectors
            pl.BlockSpec((1, d), lambda i: (0, 0)),          # conv output bias
            pl.BlockSpec((1, d), lambda i: (0, 0)),          # LN gamma
            pl.BlockSpec((1, d), lambda i: (0, 0)),          # LN beta
        ],
        out_specs=pl.BlockSpec((tm, d), lambda i: (i, 0)),
        out_shape=jax.ShapeDtypeStruct((n, d), jnp.float32),
        scratch_shapes=[
            pltpu.VMEM((tm, d), jnp.float32),                # per-tile accumulator
        ],
        compiler_params=pltpu.CompilerParams(
            dimension_semantics=("parallel",),
            vmem_limit_bytes=48 * 1024 * 1024),
    )(xlT3, xr3, adj, x, att_t, bias, gamma, beta)


def gat_block(x, adj, params, *, apply_relu, tm=ROW_TILE):
    """One block: GATv2Conv(heads, concat=False) + LayerNorm + residual (+ReLU)."""
    xr3, xlT3 = _project(x, params["wr3"], params["br3"],
                         params["wlT3"], params["blT3"])
    return _gat_attention(xlT3, xr3, adj, x, params["att_t"], params["bias"],
                          params["gamma"], params["beta"],
                          apply_relu=apply_relu, tm=tm)


def paragraph_gat_inference(x, edge_index, params1, params2, *, tm=ROW_TILE):
    """Forward of ParagraphGATInference on (x, edge_index)."""
    n, d = x.shape
    n_pad = ((max(n, tm) + tm - 1) // tm) * tm
    src, dst = edge_index[0], edge_index[1]
    # dense adjacency mask: adj[i, j] = 1 iff edge j -> i; add self-loops
    # (also on padding rows so every softmax row has >= 1 unmasked entry).
    adj = jnp.zeros((n_pad, n_pad), jnp.float32).at[dst, src].set(1.0)
    adj = jnp.maximum(adj, jnp.eye(n_pad, dtype=jnp.float32))
    adj = adj.astype(jnp.bfloat16)       # mask only -> halves O(N^2) traffic
    if n_pad != n:
        x = jnp.concatenate([x, jnp.zeros((n_pad - n, d), x.dtype)], axis=0)
    x1 = gat_block(x, adj, params1, apply_relu=True, tm=tm)    # conv1+norm1+res+ReLU
    x2 = gat_block(x1, adj, params2, apply_relu=False, tm=tm)  # conv2+norm2+res
    return x2[:n]


# ---------------------------------------------------------------------------
# Parameter construction / kernel-layout preparation
# ---------------------------------------------------------------------------
def init_gat_block_params(key, hidden_dim, heads):
    ks = jax.random.split(key, 3)
    scale = 1.0 / jnp.sqrt(jnp.float32(hidden_dim))
    return dict(
        wl=jax.random.normal(ks[0], (hidden_dim, heads * hidden_dim), jnp.float32) * scale,
        wr=jax.random.normal(ks[1], (hidden_dim, heads * hidden_dim), jnp.float32) * scale,
        att=jax.random.normal(ks[2], (heads, hidden_dim), jnp.float32) * scale,
        bl=jnp.zeros((1, heads * hidden_dim), jnp.float32),
        br=jnp.zeros((1, heads * hidden_dim), jnp.float32),
        bias=jnp.zeros((1, hidden_dim), jnp.float32),
        gamma=jnp.ones((1, hidden_dim), jnp.float32),
        beta=jnp.zeros((1, hidden_dim), jnp.float32),
    )


def prepare_block_params(p):
    """Re-lay-out raw (PyG-style) parameters for the kernels (one-time, tiny)."""
    heads, d = p["att"].shape
    return dict(
        wr3=p["wr"].reshape(d, heads, d).transpose(1, 0, 2),    # (H, D, D)
        br3=p["br"].reshape(heads, d)[:, None, :],              # (H, 1, D)
        wlT3=p["wl"].reshape(d, heads, d).transpose(1, 2, 0),   # (H, D, D) = Wl_h^T
        blT3=p["bl"].reshape(heads, d)[:, :, None],             # (H, D, 1)
        att_t=p["att"][:, :, None],                             # (H, D, 1)
        bias=p["bias"], gamma=p["gamma"], beta=p["beta"],       # (1, D)
    )


# ---------------------------------------------------------------------------
# Pure-JAX reference (sanity check) -- uses the same HIGHEST-precision matmuls
# so the comparison is not dominated by default bf16 MXU rounding.
# ---------------------------------------------------------------------------
def _reference_block(x, adj, p, apply_relu):
    heads, d = p["att"].shape
    xl = jnp.dot(x, p["wl"], precision=HIGHEST) + p["bl"]
    xr = jnp.dot(x, p["wr"], precision=HIGHEST) + p["br"]
    acc = jnp.zeros_like(x)
    for h in range(heads):
        xl_h = xl[:, h * d:(h + 1) * d]
        xr_h = xr[:, h * d:(h + 1) * d]
        s = xr_h[:, None, :] + xl_h[None, :, :]
        s = jnp.where(s > 0, s, NEG_SLOPE * s)
        e = jnp.einsum("ijd,d->ij", s, p["att"][h], precision=HIGHEST)
        e = jnp.where(adj > 0, e, -1e30)
        alpha = jax.nn.softmax(e, axis=-1)
        acc = acc + jnp.dot(alpha, xl_h, precision=HIGHEST)
    conv = acc / heads + p["bias"]
    mu = conv.mean(-1, keepdims=True)
    var = ((conv - mu) ** 2).mean(-1, keepdims=True)
    y = (conv - mu) * jax.lax.rsqrt(var + LN_EPS) * p["gamma"] + p["beta"] + x
    return jnp.maximum(y, 0.0) if apply_relu else y


if __name__ == "__main__":
    HIDDEN_DIM = 32
    HEADS = 8
    N_NODES = 200      # padded to 256 internally -> grid of 2 row tiles of 128

    key = jax.random.PRNGKey(0)
    kx, ke1, ke2, kp1, kp2 = jax.random.split(key, 5)

    x = jax.random.normal(kx, (N_NODES, HIDDEN_DIM), jnp.float32)

    # deterministic graph: bidirectional ring + 64 random chords
    idx = jnp.arange(N_NODES, dtype=jnp.int32)
    ring_src = jnp.concatenate([idx, (idx + 1) % N_NODES])
    ring_dst = jnp.concatenate([(idx + 1) % N_NODES, idx])
    chord_src = jax.random.randint(ke1, (64,), 0, N_NODES, dtype=jnp.int32)
    chord_dst = jax.random.randint(ke2, (64,), 0, N_NODES, dtype=jnp.int32)
    src = jnp.concatenate([ring_src, chord_src])
    dst = jnp.concatenate([ring_dst, chord_dst])
    edge_index = jnp.stack([src, dst], axis=0)   # (2, E), row0=source, row1=target

    raw1 = init_gat_block_params(kp1, HIDDEN_DIM, HEADS)
    raw2 = init_gat_block_params(kp2, HIDDEN_DIM, HEADS)
    params1 = prepare_block_params(raw1)
    params2 = prepare_block_params(raw2)

    out = paragraph_gat_inference(x, edge_index, params1, params2)
    out = jax.block_until_ready(out)

    # sanity check against the pure-JAX reference (unpadded)
    adj_ref = jnp.zeros((N_NODES, N_NODES), jnp.float32).at[dst, src].set(1.0)
    adj_ref = jnp.maximum(adj_ref, jnp.eye(N_NODES, dtype=jnp.float32))
    ref = _reference_block(_reference_block(x, adj_ref, raw1, True), adj_ref, raw2, False)
    assert out.shape == (N_NODES, HIDDEN_DIM)
    max_err = jnp.max(jnp.abs(out - ref))
    assert jnp.allclose(out, ref, rtol=5e-3, atol=5e-3), f"mismatch vs reference (max abs err {max_err})"

    print("KERNEL_OK")
</pallas_src>

<mosaic_0001>
module attributes {stable_mosaic.version = 11 : i64} {
  func.func @_project_kernel(%arg0: i32, %arg1: memref<256x32xf32, #tpu.memory_space<vmem>>, %arg2: memref<32x256xf32, #tpu.memory_space<vmem>>, %arg3: memref<1x32x32xf32, #tpu.memory_space<vmem>>, %arg4: memref<1x1x32xf32, #tpu.memory_space<vmem>>, %arg5: memref<1x32x32xf32, #tpu.memory_space<vmem>>, %arg6: memref<1x32x1xf32, #tpu.memory_space<vmem>>, %arg7: memref<1x256x32xf32, #tpu.memory_space<vmem>>, %arg8: memref<1x32x256xf32, #tpu.memory_space<vmem>>) attributes {dimension_semantics = [#tpu.dimension_semantics<parallel>], iteration_bounds = array<i64: 8>, scalar_prefetch = 0 : i64, scratch_operands = 0 : i64, tpu.core_type = #tpu.core_type<tc>, window_params = [{pipeline_mode = #tpu.pipeline_mode<synchronous>, transform_indices = @transform_0, window_bounds = array<i64: 256, 32>}, {pipeline_mode = #tpu.pipeline_mode<synchronous>, transform_indices = @transform_1, window_bounds = array<i64: 32, 256>}, {transform_indices = @transform_2, window_bounds = array<i64: 1, 32, 32>}, {transform_indices = @transform_3, window_bounds = array<i64: 1, 1, 32>}, {transform_indices = @transform_4, window_bounds = array<i64: 1, 32, 32>}, {transform_indices = @transform_5, window_bounds = array<i64: 1, 32, 1>}, {transform_indices = @transform_6, window_bounds = array<i64: 1, 256, 32>}, {transform_indices = @transform_7, window_bounds = array<i64: 1, 32, 256>}]} {
    %c0 = arith.constant 0 : index
    %c0_0 = arith.constant 0 : index
    %0 = vector.load %arg1[%c0, %c0_0] : memref<256x32xf32, #tpu.memory_space<vmem>>, vector<256x32xf32>
    %c0_1 = arith.constant 0 : index
    %c0_2 = arith.constant 0 : index
    %1 = vector.load %arg2[%c0_1, %c0_2] : memref<32x256xf32, #tpu.memory_space<vmem>>, vector<32x256xf32>
    %c0_3 = arith.constant 0 : index
    %c0_4 = arith.constant 0 : index
    %c0_5 = arith.constant 0 : index
    %2 = vector.load %arg3[%c0_3, %c0_4, %c0_5] : memref<1x32x32xf32, #tpu.memory_space<vmem>>, vector<1x32x32xf32>
    %3 = vector.shape_cast %2 : vector<1x32x32xf32> to vector<32x32xf32>
    %cst = arith.constant dense<0.000000e+00> : vector<256x32xf32>
    %4 = tpu.matmul %0, %3, %cst {dimension_numbers = #tpu.dot_dimension_numbers<[1], [0], [0], [1], [0, 0, 1, 1], [], []>, precision = #tpu.contract_precision<fp32>} : vector<256x32xf32>, vector<32x32xf32>, vector<256x32xf32> -> vector<256x32xf32>
    %c0_6 = arith.constant 0 : index
    %c0_7 = arith.constant 0 : index
    %c0_8 = arith.constant 0 : index
    %5 = vector.load %arg4[%c0_6, %c0_7, %c0_8] : memref<1x1x32xf32, #tpu.memory_space<vmem>>, vector<1x1x32xf32>
    %6 = vector.shape_cast %5 : vector<1x1x32xf32> to vector<1x32xf32>
    %7 = vector.broadcast %6 : vector<1x32xf32> to vector<256x32xf32>
    %8 = arith.addf %4, %7 : vector<256x32xf32>
    %c0_9 = arith.constant 0 : index
    %c0_10 = arith.constant 0 : index
    %c0_11 = arith.constant 0 : index
    %9 = vector.load %arg7[%c0_9, %c0_10, %c0_11] : memref<1x256x32xf32, #tpu.memory_space<vmem>>, vector<1x256x32xf32>
    %10 = vector.shape_cast %9 : vector<1x256x32xf32> to vector<256x32xf32>
    %11 = vector.shape_cast %8 : vector<256x32xf32> to vector<1x256x32xf32>
    tpu.vector_store %arg7[%c0_9, %c0_10, %c0_11], %11 {strides = array<i32>} : memref<1x256x32xf32, #tpu.memory_space<vmem>>, vector<1x256x32xf32>,
    %c0_12 = arith.constant 0 : index
    %c0_13 = arith.constant 0 : index
    %c0_14 = arith.constant 0 : index
    %12 = vector.load %arg5[%c0_12, %c0_13, %c0_14] : memref<1x32x32xf32, #tpu.memory_space<vmem>>, vector<1x32x32xf32>
    %13 = vector.shape_cast %12 : vector<1x32x32xf32> to vector<32x32xf32>
    %cst_15 = arith.constant dense<0.000000e+00> : vector<32x256xf32>
    %14 = tpu.matmul %13, %1, %cst_15 {dimension_numbers = #tpu.dot_dimension_numbers<[1], [0], [0], [1], [0, 0, 1, 1], [], []>, precision = #tpu.contract_precision<fp32>} : vector<32x32xf32>, vector<32x256xf32>, vector<32x256xf32> -> vector<32x256xf32>
    %c0_16 = arith.constant 0 : index
    %c0_17 = arith.constant 0 : index
    %c0_18 = arith.constant 0 : index
    %15 = vector.load %arg6[%c0_16, %c0_17, %c0_18] : memref<1x32x1xf32, #tpu.memory_space<vmem>>, vector<1x32x1xf32>
    %16 = vector.shape_cast %15 : vector<1x32x1xf32> to vector<32x1xf32>
    %17 = vector.broadcast %16 : vector<32x1xf32> to vector<32x256xf32>
    %18 = arith.addf %14, %17 : vector<32x256xf32>
    %c0_19 = arith.constant 0 : index
    %c0_20 = arith.constant 0 : index
    %c0_21 = arith.constant 0 : index
    %19 = vector.load %arg8[%c0_19, %c0_20, %c0_21] : memref<1x32x256xf32, #tpu.memory_space<vmem>>, vector<1x32x256xf32>
    %20 = vector.shape_cast %19 : vector<1x32x256xf32> to vector<32x256xf32>
    %21 = vector.shape_cast %18 : vector<32x256xf32> to vector<1x32x256xf32>
    tpu.vector_store %arg8[%c0_19, %c0_20, %c0_21], %21 {strides = array<i32>} : memref<1x32x256xf32, #tpu.memory_space<vmem>>, vector<1x32x256xf32>,
    return
  }
  func.func @transform_0(%arg0: i32) -> (i32, i32) {
    %c0_i32 = arith.constant 0 : i32
    %c0_i32_0 = arith.constant 0 : i32
    %c0_i32_1 = arith.constant 0 : i32
    return %c0_i32, %c0_i32_0 : i32, i32
  }
  func.func @transform_1(%arg0: i32) -> (i32, i32) {
    %c0_i32 = arith.constant 0 : i32
    %c0_i32_0 = arith.constant 0 : i32
    %c0_i32_1 = arith.constant 0 : i32
    return %c0_i32, %c0_i32_0 : i32, i32
  }
  func.func @transform_2(%arg0: i32) -> (i32, i32, i32) {
    %c0_i32 = arith.constant 0 : i32
    %c0_i32_0 = arith.constant 0 : i32
    %c0_i32_1 = arith.constant 0 : i32
    return %arg0, %c0_i32, %c0_i32_0 : i32, i32, i32
  }
  func.func @transform_3(%arg0: i32) -> (i32, i32, i32) {
    %c0_i32 = arith.constant 0 : i32
    %c0_i32_0 = arith.constant 0 : i32
    %c0_i32_1 = arith.constant 0 : i32
    return %arg0, %c0_i32, %c0_i32_0 : i32, i32, i32
  }
  func.func @transform_4(%arg0: i32) -> (i32, i32, i32) {
    %c0_i32 = arith.constant 0 : i32
    %c0_i32_0 = arith.constant 0 : i32
    %c0_i32_1 = arith.constant 0 : i32
    return %arg0, %c0_i32, %c0_i32_0 : i32, i32, i32
  }
  func.func @transform_5(%arg0: i32) -> (i32, i32, i32) {
    %c0_i32 = arith.constant 0 : i32
    %c0_i32_0 = arith.constant 0 : i32
    %c0_i32_1 = arith.constant 0 : i32
    return %arg0, %c0_i32, %c0_i32_0 : i32, i32, i32
  }
  func.func @transform_6(%arg0: i32) -> (i32, i32, i32) {
    %c0_i32 = arith.constant 0 : i32
    %c0_i32_0 = arith.constant 0 : i32
    %c0_i32_1 = arith.constant 0 : i32
    return %arg0, %c0_i32, %c0_i32_0 : i32, i32, i32
  }
  func.func @transform_7(%arg0: i32) -> (i32, i32, i32) {
    %c0_i32 = arith.constant 0 : i32
    %c0_i32_0 = arith.constant 0 : i32
    %c0_i32_1 = arith.constant 0 : i32
    return %arg0, %c0_i32, %c0_i32_0 : i32, i32, i32
  }
}

</mosaic_0001>

<llo_original>
// kernel: tpu_custom_call.1
$region0: #{tpu_custom_call.1}
  #allocation0 [shape = 'u32[]', space=smem, size = 0x4, offset = 0x4, fixed_abs, tag = 'smem constant byte address 0x4 - core index']
  #allocation1 [shape = 'u32[72,128]{1,0:T(1,128)}', space=vmem, size = 0x9000, scoped, tag = 'internal scratch']
  %s0 = inlined_call_operand.vmem [shape: f32[256,32], index: 0, kind: input, shape index: {}]
  %s1 = inlined_call_operand.vmem [shape: f32[32,256], index: 1, kind: input, shape index: {}]
  %s2 = inlined_call_operand.vmem [shape: f32[8,32,32], index: 2, kind: input, shape index: {}]
  %s3 = inlined_call_operand.hbm [shape: f32[8,1,32], index: 3, kind: input, shape index: {}]
  %s4 = inlined_call_operand.vmem [shape: f32[8,32,32], index: 4, kind: input, shape index: {}]
  %s5 = inlined_call_operand.vmem [shape: f32[8,32,1], index: 5, kind: input, shape index: {}]
  %s6 = inlined_call_operand.vmem [shape: f32[8,256,32], index: 6, kind: output, shape index: {0}]
  %s7 = inlined_call_operand.hbm [shape: f32[8,32,256], index: 7, kind: output, shape index: {1}]
  %8 = xla_tuple %s6, %s7
  %s9 = sld [smem:[#allocation0]]
  $region69: #{tpu_custom_call.1} parent=0
    _
  %s11 = ssub.s32 1, %s9
  %s12 = scalar_select 0, %s11, %s9
  $region1: #{tpu_custom_call.1} parent=0
    #allocation2 [shape = 'u8[1024]{0}', space=vmem, size = 0x400, scoped, tag = 'input window, operand 3']
    #allocation3 [shape = 's32[2]{0}', space=sflag, size = 0x8, scoped, tag = 'scoped memory for tpu_custom_call.1']
    #allocation4 [shape = 's32[2]{0}', space=sflag, size = 0x8, scoped, tag = 'scoped memory for tpu_custom_call.1']
    #allocation5 [shape = 'u8[65536]{0}', space=vmem, size = 0x10000, scoped, tag = 'output window, operand 1']
    %13 = vsyncpa [#allocation3], 0
    %s14 = scalar_lea.sflag [#allocation3], 1
    %15 = vsyncpa %s14, 0
    %16 = vsyncpa [#allocation4], 0
    %s17 = scalar_lea.sflag [#allocation4], 1
    %18 = vsyncpa %s17, 0
    loop: start=0, step=1, limit=10
    $region2: #{tpu_custom_call.1} parent=1 // loop_pre_header
      _
    $region3: #{tpu_custom_call.1} parent=1 // loop_header
      %s20 = sphi 0, %s24
      %p21 = scmp.ge.s32.totalorder %s20, 10
      %s28 = sphi 0, %s28
      %s30 = sphi 0, %s28
      %s31 = sphi 0, %s30
      %s45 = sphi 0, %s31
      %s49 = sphi 0, %s49
      %s51 = sphi 0, %s49
      %s52 = sphi 0, %s51
      %s66 = sphi 0, %s52
      %s72 = sphi 0, %s74
      %s75 = sphi 0, %s72
      %s76 = sphi 0, %s75
      %s92 = sphi 0, %s76
      %s98 = sphi 0, %s100
      %s101 = sphi 0, %s98
      %s102 = sphi 0, %s101
      %s118 = sphi 0, %s102
      %s124 = sphi 0, %s126
      %s127 = sphi 0, %s124
      %s128 = sphi 0, %s127
      %s144 = sphi 0, %s128
      %s150 = sphi 0, %s152
      %s153 = sphi 0, %s150
      %s154 = sphi 0, %s153
      %s170 = sphi 0, %s154
      %s176 = sphi 0, %s178
      %s179 = sphi 0, %s176
      %s180 = sphi 0, %s179
      %s196 = sphi 0, %s180
      %s202 = sphi 0, %s204
      %s205 = sphi 0, %s202
      %s206 = sphi 0, %s205
      %s222 = sphi 0, %s206
    $region4: #{tpu_custom_call.1} parent=1 // loop_header_branch
      %23 = sbr.rel (%p21) target = $region8
    $region5: #{tpu_custom_call.1} parent=1 // loop_body
      %s25 = ssub.s32 %s20, 1
      %s26 = ssub.s32 %s20, 2
      %s27 = sadd.s32 %s20, 1
      %s29 = sadd.s32 %s28, 1
      %p32 = scmp.eq.s32.totalorder %s20, 7
      %p33 = scmp.ne.s32.totalorder %s28, %s30
      %p34 = scmp.eq.s32.totalorder %s20, 0
      %p35 = por %p33, %p34
      %p36 = scmp.ne.s32.totalorder %s28, %s30
      %p37 = scmp.eq.s32.totalorder %s25, 7
      %p38 = por %p36, %p37
      %p39 = scmp.ne.s32.totalorder %s30, %s31
      %p40 = scmp.eq.s32.totalorder %s25, 0
      %p41 = por %p39, %p40
      %p42 = scmp.ne.s32.totalorder %s30, %s31
      %p43 = scmp.eq.s32.totalorder %s26, 7
      %p44 = por %p42, %p43
      %p46 = scmp.ne.s32.totalorder %s31, %s45
      %p47 = scmp.eq.s32.totalorder %s26, 0
      %p48 = por %p46, %p47
      %s50 = sadd.s32 %s49, 1
      %p53 = scmp.eq.s32.totalorder %s20, 7
      %p54 = scmp.ne.s32.totalorder %s49, %s51
      %p55 = scmp.eq.s32.totalorder %s20, 0
      %p56 = por %p54, %p55
      %p57 = scmp.ne.s32.totalorder %s49, %s51
      %p58 = scmp.eq.s32.totalorder %s25, 7
      %p59 = por %p57, %p58
      %p60 = scmp.ne.s32.totalorder %s51, %s52
      %p61 = scmp.eq.s32.totalorder %s25, 0
      %p62 = por %p60, %p61
      %p63 = scmp.ne.s32.totalorder %s51, %s52
      %p64 = scmp.eq.s32.totalorder %s26, 7
      %p65 = por %p63, %p64
      %p67 = scmp.ne.s32.totalorder %s52, %s66
      %p68 = scmp.eq.s32.totalorder %s26, 0
      %p69 = por %p67, %p68
      %s70 = ssub.s32 %s20, %s27
      %p71 = scmp.eq.s32.totalorder %s70, 0
      %s73 = sadd.s32 %s72, 1
      %s74 = scalar_select %p71, %s72, %s73
      %p77 = pneg %p71
      %p78 = scmp.eq.s32.totalorder %s20, 7
      %p79 = por %p77, %p78
      %p80 = scmp.ne.s32.totalorder %s72, %s75
      %p81 = scmp.eq.s32.totalorder %s20, 0
      %p82 = por %p80, %p81
      %p83 = scmp.ne.s32.totalorder %s72, %s75
      %p84 = scmp.eq.s32.totalorder %s25, 7
      %p85 = por %p83, %p84
      %p86 = scmp.ne.s32.totalorder %s75, %s76
      %p87 = scmp.eq.s32.totalorder %s25, 0
      %p88 = por %p86, %p87
      %p89 = scmp.ne.s32.totalorder %s75, %s76
      %p90 = scmp.eq.s32.totalorder %s26, 7
      %p91 = por %p89, %p90
      %p93 = scmp.ne.s32.totalorder %s76, %s92
      %p94 = scmp.eq.s32.totalorder %s26, 0
      %p95 = por %p93, %p94
      %s96 = ssub.s32 %s20, %s27
      %p97 = scmp.eq.s32.totalorder %s96, 0
      %s99 = sadd.s32 %s98, 1
      %s100 = scalar_select %p97, %s98, %s99
      %p103 = pneg %p97
      %p104 = scmp.eq.s32.totalorder %s20, 7
      %p105 = por %p103, %p104
      %p106 = scmp.ne.s32.totalorder %s98, %s101
      %p107 = scmp.eq.s32.totalorder %s20, 0
      %p108 = por %p106, %p107
      %p109 = scmp.ne.s32.totalorder %s98, %s101
      %p110 = scmp.eq.s32.totalorder %s25, 7
      %p111 = por %p109, %p110
      %p112 = scmp.ne.s32.totalorder %s101, %s102
      %p113 = scmp.eq.s32.totalorder %s25, 0
      %p114 = por %p112, %p113
      %p115 = scmp.ne.s32.totalorder %s101, %s102
      %p116 = scmp.eq.s32.totalorder %s26, 7
      %p117 = por %p115, %p116
      %p119 = scmp.ne.s32.totalorder %s102, %s118
      %p120 = scmp.eq.s32.totalorder %s26, 0
      %p121 = por %p119, %p120
      %s122 = ssub.s32 %s20, %s27
      %p123 = scmp.eq.s32.totalorder %s122, 0
      %s125 = sadd.s32 %s124, 1
      %s126 = scalar_select %p123, %s124, %s125
      %p129 = pneg %p123
      %p130 = scmp.eq.s32.totalorder %s20, 7
      %p131 = por %p129, %p130
      %p132 = scmp.ne.s32.totalorder %s124, %s127
      %p133 = scmp.eq.s32.totalorder %s20, 0
      %p134 = por %p132, %p133
      %p135 = scmp.ne.s32.totalorder %s124, %s127
      %p136 = scmp.eq.s32.totalorder %s25, 7
      %p137 = por %p135, %p136
      %p138 = scmp.ne.s32.totalorder %s127, %s128
      %p139 = scmp.eq.s32.totalorder %s25, 0
      %p140 = por %p138, %p139
      %p141 = scmp.ne.s32.totalorder %s127, %s128
      %p142 = scmp.eq.s32.totalorder %s26, 7
      %p143 = por %p141, %p142
      %p145 = scmp.ne.s32.totalorder %s128, %s144
      %p146 = scmp.eq.s32.totalorder %s26, 0
      %p147 = por %p145, %p146
      %s148 = ssub.s32 %s20, %s27
      %p149 = scmp.eq.s32.totalorder %s148, 0
      %s151 = sadd.s32 %s150, 1
      %s152 = scalar_select %p149, %s150, %s151
      %p155 = pneg %p149
      %p156 = scmp.eq.s32.totalorder %s20, 7
      %p157 = por %p155, %p156
      %p158 = scmp.ne.s32.totalorder %s150, %s153
      %p159 = scmp.eq.s32.totalorder %s20, 0
      %p160 = por %p158, %p159
      %p161 = scmp.ne.s32.totalorder %s150, %s153
      %p162 = scmp.eq.s32.totalorder %s25, 7
      %p163 = por %p161, %p162
      %p164 = scmp.ne.s32.totalorder %s153, %s154
      %p165 = scmp.eq.s32.totalorder %s25, 0
      %p166 = por %p164, %p165
      %p167 = scmp.ne.s32.totalorder %s153, %s154
      %p168 = scmp.eq.s32.totalorder %s26, 7
      %p169 = por %p167, %p168
      %p171 = scmp.ne.s32.totalorder %s154, %s170
      %p172 = scmp.eq.s32.totalorder %s26, 0
      %p173 = por %p171, %p172
      %s174 = ssub.s32 %s20, %s27
      %p175 = scmp.eq.s32.totalorder %s174, 0
      %s177 = sadd.s32 %s176, 1
      %s178 = scalar_select %p175, %s176, %s177
      %p181 = pneg %p175
      %p182 = scmp.eq.s32.totalorder %s20, 7
      %p183 = por %p181, %p182
      %p184 = scmp.ne.s32.totalorder %s176, %s179
      %p185 = scmp.eq.s32.totalorder %s20, 0
      %p186 = por %p184, %p185
      %p187 = scmp.ne.s32.totalorder %s176, %s179
      %p188 = scmp.eq.s32.totalorder %s25, 7
      %p189 = por %p187, %p188
      %p190 = scmp.ne.s32.totalorder %s179, %s180
      %p191 = scmp.eq.s32.totalorder %s25, 0
      %p192 = por %p190, %p191
      %p193 = scmp.ne.s32.totalorder %s179, %s180
      %p194 = scmp.eq.s32.totalorder %s26, 7
      %p195 = por %p193, %p194
      %p197 = scmp.ne.s32.totalorder %s180, %s196
      %p198 = scmp.eq.s32.totalorder %s26, 0
      %p199 = por %p197, %p198
      %s200 = ssub.s32 %s20, %s27
      %p201 = scmp.eq.s32.totalorder %s200, 0
      %s203 = sadd.s32 %s202, 1
      %s204 = scalar_select %p201, %s202, %s203
      %p207 = pneg %p201
      %p208 = scmp.eq.s32.totalorder %s20, 7
      %p209 = por %p207, %p208
      %p210 = scmp.ne.s32.totalorder %s202, %s205
      %p211 = scmp.eq.s32.totalorder %s20, 0
      %p212 = por %p210, %p211
      %p213 = scmp.ne.s32.totalorder %s202, %s205
      %p214 = scmp.eq.s32.totalorder %s25, 7
      %p215 = por %p213, %p214
      %p216 = scmp.ne.s32.totalorder %s205, %s206
      %p217 = scmp.eq.s32.totalorder %s25, 0
      %p218 = por %p216, %p217
      %p219 = scmp.ne.s32.totalorder %s205, %s206
      %p220 = scmp.eq.s32.totalorder %s26, 7
      %p221 = por %p219, %p220
      %p223 = scmp.ne.s32.totalorder %s206, %s222
      %p224 = scmp.eq.s32.totalorder %s26, 0
      %p225 = por %p223, %p224
      %p226 = scmp.le.s32.totalorder 1, %s20
      %p227 = scmp.lt.s32.totalorder %s20, 9
      %p228 = pnand %p226, %p227
      %p229 = pneg %p228
      // Predicated region
      $region9: #{tpu_custom_call.1} parent=5 // pred_check
        _
      $region10: #{tpu_custom_call.1} parent=5 // pred_check_branch
        %231 = sbr.rel (%p228) target = $region12
      $region11: #{tpu_custom_call.1} parent=5 // pred_region
        %s232 = ssub.s32 %s20, 1
        // Predicated region
        $region13: #{tpu_custom_call.1} parent=11 // pred_check
          %p233 = pneg %p41
        $region14: #{tpu_custom_call.1} parent=11 // pred_check_branch
          %235 = sbr.rel (%p233) target = $region16
        $region15: #{tpu_custom_call.1} parent=11 // pred_region
          _
        $region16: #{tpu_custom_call.1} parent=11 // pred_fallthru
          _
        // Predicated region
        $region17: #{tpu_custom_call.1} parent=11 // pred_check
          %p236 = pneg %p62
        $region18: #{tpu_custom_call.1} parent=11 // pred_check_branch
          %238 = sbr.rel (%p236) target = $region20
        $region19: #{tpu_custom_call.1} parent=11 // pred_region
          _
        $region20: #{tpu_custom_call.1} parent=11 // pred_fallthru
          _
      $region12: #{tpu_custom_call.1} parent=5 // pred_fallthru
        _
      %p239 = scmp.lt.s32.totalorder %s20, 8
      // Predicated region
      $region21: #{tpu_custom_call.1} parent=5 // pred_check
        %p240 = pneg %p239
      $region22: #{tpu_custom_call.1} parent=5 // pred_check_branch
        %242 = sbr.rel (%p240) target = $region24
      $region23: #{tpu_custom_call.1} parent=5 // pred_region
        // Predicated region
        $region25: #{tpu_custom_call.1} parent=23 // pred_check
          %p243 = pneg %p82
        $region26: #{tpu_custom_call.1} parent=23 // pred_check_branch
          %245 = sbr.rel (%p243) target = $region28
        $region27: #{tpu_custom_call.1} parent=23 // pred_region
          %p246 = scmp.lt.s32.totalorder %s20, 7
          %s247 = scalar_select %p246, %s20, 7
          %s248 = smul.addr %s247, 4
          %s249 = smul.addr %s248, 8
          %s250 = scalar_lea.vmem %s2, %s249
        $region28: #{tpu_custom_call.1} parent=23 // pred_fallthru
          _
        // Predicated region
        $region29: #{tpu_custom_call.1} parent=23 // pred_check
          %p251 = pneg %p108
        $region30: #{tpu_custom_call.1} parent=23 // pred_check_branch
          %253 = sbr.rel (%p251) target = $region32
        $region31: #{tpu_custom_call.1} parent=23 // pred_region
          %s254 = sand.u32 %s98, 1
          %s255 = scalar_lea.sflag [#allocation3], %s254
          %s256 = sand.u32 %s98, 1
          %s257 = scalar_lea.vmem [#allocation2], %s256
          %259 = vsyncadd %s255, 0
          %s260 = scalar_lea.hbm %s3, %s20
          %s262 = sshll.u32 %s260, 4
          %s263 = int_to_ptr.hbm [resolvable:$true] %s262
          %s264 = sshll.u32 %s257, 4
          %s265 = int_to_ptr.vmem [resolvable:$true] %s264
          %267 = dma.hbm_to_vmem [thread:$0]  %s263, 16, %s265, %s255
        $region32: #{tpu_custom_call.1} parent=23 // pred_fallthru
          _
        // Predicated region
        $region33: #{tpu_custom_call.1} parent=23 // pred_check
          %p268 = pneg %p134
        $region34: #{tpu_custom_call.1} parent=23 // pred_check_branch
          %270 = sbr.rel (%p268) target = $region36
        $region35: #{tpu_custom_call.1} parent=23 // pred_region
          %p271 = scmp.lt.s32.totalorder %s20, 7
          %s272 = scalar_select %p271, %s20, 7
          %s273 = smul.addr %s272, 4
          %s274 = smul.addr %s273, 8
          %s275 = scalar_lea.vmem %s4, %s274
        $region36: #{tpu_custom_call.1} parent=23 // pred_fallthru
          _
        // Predicated region
        $region37: #{tpu_custom_call.1} parent=23 // pred_check
          %p276 = pneg %p160
        $region38: #{tpu_custom_call.1} parent=23 // pred_check_branch
          %278 = sbr.rel (%p276) target = $region40
        $region39: #{tpu_custom_call.1} parent=23 // pred_region
          %p279 = scmp.lt.s32.totalorder %s20, 7
          %s280 = scalar_select %p279, %s20, 7
          %s281 = smul.addr %s280, 4
          %s282 = smul.addr %s281, 8
          %s283 = scalar_lea.vmem %s5, %s282
        $region40: #{tpu_custom_call.1} parent=23 // pred_fallthru
          _
      $region24: #{tpu_custom_call.1} parent=5 // pred_fallthru
        _
      %p284 = scmp.le.s32.totalorder 1, %s20
      %p285 = scmp.lt.s32.totalorder %s20, 9
      %p286 = pnand %p284, %p285
      %p287 = pneg %p286
      // Predicated region
      $region41: #{tpu_custom_call.1} parent=5 // pred_check
        _
      $region42: #{tpu_custom_call.1} parent=5 // pred_check_branch
        %289 = sbr.rel (%p286) target = $region44
      $region43: #{tpu_custom_call.1} parent=5 // pred_region
        %s290 = ssub.s32 %s20, 1
        %s291 = sand.u32 %s101, 1
        %s292 = scalar_lea.sflag [#allocation3], %s291
        %s293 = sand.u32 %s101, 1
        %s294 = scalar_lea.vmem [#allocation2], %s293
        // Predicated region
        $region45: #{tpu_custom_call.1} parent=43 // pred_check
          %p295 = pneg %p114
        $region46: #{tpu_custom_call.1} parent=43 // pred_check_branch
          %297 = sbr.rel (%p295) target = $region48
        $region47: #{tpu_custom_call.1} parent=43 // pred_region
          %299 = dma.done %s292, 16
        $region48: #{tpu_custom_call.1} parent=43 // pred_fallthru
          _
        %p300 = pneg %p41
        %p301 = pneg %p38
        %p302 = pneg %p62
        %p303 = pneg %p59
        %p304 = scmp.lt.s32.totalorder %s25, 7
        %s305 = scalar_select %p304, %s25, 7
        %s306 = smul.addr %s305, 4
        %s307 = smul.addr %s306, 8
        %s308 = scalar_lea.vmem %s2, %s307
        %p309 = pneg %p88
        %p310 = pneg %p85
        %s311 = sand.u32 %s101, 1
        %s312 = scalar_lea.sflag [#allocation3], %s311
        %s313 = sand.u32 %s101, 1
        %s314 = scalar_lea.vmem [#allocation2], %s313
        %p315 = pneg %p114
        %p316 = pneg %p111
        %p317 = scmp.lt.s32.totalorder %s25, 7
        %s318 = scalar_select %p317, %s25, 7
        %s319 = smul.addr %s318, 4
        %s320 = smul.addr %s319, 8
        %s321 = scalar_lea.vmem %s4, %s320
        %p322 = pneg %p140
        %p323 = pneg %p137
        %p324 = scmp.lt.s32.totalorder %s25, 7
        %s325 = scalar_select %p324, %s25, 7
        %s326 = smul.addr %s325, 4
        %s327 = smul.addr %s326, 8
        %s328 = scalar_lea.vmem %s5, %s327
        %p329 = pneg %p166
        %p330 = pneg %p163
        %p331 = pneg %p192
        %p332 = pneg %p189
        %p333 = scmp.lt.s32.totalorder %s25, 7
        %s334 = scalar_select %p333, %s25, 7
        %s335 = smul.addr %s334, 32
        %s336 = smul.addr %s335, 8
        %s337 = scalar_lea.vmem %s6, %s336
        %p338 = pneg %p218
        %p339 = pneg %p215
        %s340 = sand.u32 %s205, 1
        %s341 = scalar_lea.sflag [#allocation4], %s340
        %s342 = sand.u32 %s205, 1
        %s343 = smul.addr %s342, 64
        %s344 = scalar_lea.vmem [#allocation5], %s343
        %p345 = scmp.lt.s32.totalorder %s25, 7
        %s346 = scalar_select %p345, %s25, 7
        %s347 = smul.addr %s346, 4
        %s348 = smul.addr %s347, 8
        %s349 = scalar_lea.vmem %s2, %s348
        %p350 = scmp.lt.s32.totalorder %s25, 7
        %s351 = scalar_select %p350, %s25, 7
        %s352 = smul.addr %s351, 4
        %s353 = smul.addr %s352, 8
        %s354 = scalar_lea.vmem %s4, %s353
        %p355 = scmp.lt.s32.totalorder %s25, 7
        %s356 = scalar_select %p355, %s25, 7
        %s357 = smul.addr %s356, 4
        %s358 = smul.addr %s357, 8
        %s359 = scalar_lea.vmem %s5, %s358
        %p360 = scmp.lt.s32.totalorder %s25, 7
        %s361 = scalar_select %p360, %s25, 7
        %s362 = smul.addr %s361, 32
        %s363 = smul.addr %s362, 8
        %s364 = scalar_lea.vmem %s6, %s363
        %v365 = vld [vmem:[%s0] sm:$0xff]
        %v366 = vld [vmem:[%s0 + $0x8] sm:$0xff]
        %v367 = vld [vmem:[%s0 + $0x10] sm:$0xff]
        %v368 = vld [vmem:[%s0 + $0x18] sm:$0xff]
        %v369 = vld [vmem:[%s0 + $0x20] sm:$0xff]
        %v370 = vld [vmem:[%s0 + $0x28] sm:$0xff]
        %v371 = vld [vmem:[%s0 + $0x30] sm:$0xff]
        %v372 = vld [vmem:[%s0 + $0x38] sm:$0xff]
        %v373 = vld [vmem:[%s0 + $0x40] sm:$0xff]
        %v374 = vld [vmem:[%s0 + $0x48] sm:$0xff]
        %v375 = vld [vmem:[%s0 + $0x50] sm:$0xff]
        %v376 = vld [vmem:[%s0 + $0x58] sm:$0xff]
        %v377 = vld [vmem:[%s0 + $0x60] sm:$0xff]
        %v378 = vld [vmem:[%s0 + $0x68] sm:$0xff]
        %v379 = vld [vmem:[%s0 + $0x70] sm:$0xff]
        %v380 = vld [vmem:[%s0 + $0x78] sm:$0xff]
        %v381 = vld [vmem:[%s0 + $0x80] sm:$0xff]
        %v382 = vld [vmem:[%s0 + $0x88] sm:$0xff]
        %v383 = vld [vmem:[%s0 + $0x90] sm:$0xff]
        %v384 = vld [vmem:[%s0 + $0x98] sm:$0xff]
        %v385 = vld [vmem:[%s0 + $0xa0] sm:$0xff]
        %v386 = vld [vmem:[%s0 + $0xa8] sm:$0xff]
        %v387 = vld [vmem:[%s0 + $0xb0] sm:$0xff]
        %v388 = vld [vmem:[%s0 + $0xb8] sm:$0xff]
        %v389 = vld [vmem:[%s0 + $0xc0] sm:$0xff]
        %v390 = vld [vmem:[%s0 + $0xc8] sm:$0xff]
        %v391 = vld [vmem:[%s0 + $0xd0] sm:$0xff]
        %v392 = vld [vmem:[%s0 + $0xd8] sm:$0xff]
        %v393 = vld [vmem:[%s0 + $0xe0] sm:$0xff]
        %v394 = vld [vmem:[%s0 + $0xe8] sm:$0xff]
        %v395 = vld [vmem:[%s0 + $0xf0] sm:$0xff]
        %v396 = vld [vmem:[%s0 + $0xf8] sm:$0xff]
        %v397 = vld [vmem:[%s1] sm:$0xff]
        %v398 = vld [vmem:[%s1 + $0x8] sm:$0xff]
        %v399 = vld [vmem:[%s1 + $0x10] sm:$0xff]
        %v400 = vld [vmem:[%s1 + $0x18] sm:$0xff]
        %v401 = vld [vmem:[%s1 + $0x20] sm:$0xff]
        %v402 = vld [vmem:[%s1 + $0x28] sm:$0xff]
        %v403 = vld [vmem:[%s1 + $0x30] sm:$0xff]
        %v404 = vld [vmem:[%s1 + $0x38] sm:$0xff]
        %v405 = vld [vmem:[%s349] sm:$0xff]
        %v406 = vld [vmem:[%s349 + $0x8] sm:$0xff]
        %v407 = vld [vmem:[%s349 + $0x10] sm:$0xff]
        %v408 = vld [vmem:[%s349 + $0x18] sm:$0xff]
        %v409 = vld [vmem:[%s294] sm:$0x1]
        %v411 = vperm.slane %v409, 0
        %vm413 = vcmask 261120
        %v415 = vsel %vm413, %v365, 0
        %v418 = vsel %vm413, %v366, 0
        %v421 = vsel %vm413, %v367, 0
        %v424 = vsel %vm413, %v368, 0
        %v427 = vsel %vm413, %v369, 0
        %v430 = vsel %vm413, %v370, 0
        %v433 = vsel %vm413, %v371, 0
        %v436 = vsel %vm413, %v372, 0
        %v439 = vsel %vm413, %v373, 0
        %v442 = vsel %vm413, %v374, 0
        %v445 = vsel %vm413, %v375, 0
        %v448 = vsel %vm413, %v376, 0
        %v451 = vsel %vm413, %v377, 0
        %v454 = vsel %vm413, %v378, 0
        %v457 = vsel %vm413, %v379, 0
        %v460 = vsel %vm413, %v380, 0
        %v463 = vsel %vm413, %v381, 0
        %v466 = vsel %vm413, %v382, 0
        %v469 = vsel %vm413, %v383, 0
        %v472 = vsel %vm413, %v384, 0
        %v475 = vsel %vm413, %v385, 0
        %v478 = vsel %vm413, %v386, 0
        %v481 = vsel %vm413, %v387, 0
        %v484 = vsel %vm413, %v388, 0
        %v487 = vsel %vm413, %v389, 0
        %v490 = vsel %vm413, %v390, 0
        %v493 = vsel %vm413, %v391, 0
        %v496 = vsel %vm413, %v392, 0
        %v499 = vsel %vm413, %v393, 0
        %v502 = vsel %vm413, %v394, 0
        %v505 = vsel %vm413, %v395, 0
        %v508 = vsel %vm413, %v396, 0
        %510 = vmatpush.msra.mxu0 0.0
        %511 = vmatpush.msra.mxu0 0.0
        %512 = vmatpush.msra.mxu0 0.0
        %513 = vmatpush.msra.mxu0 0.0
        %514 = vmatpush.msra.mxu0 0.0
        %515 = vmatpush.msra.mxu0 0.0
        %516 = vmatpush.msra.mxu0 0.0
        %517 = vmatpush.msra.mxu0 0.0
        %518 = vmatpush.msra.mxu0 0.0
        %519 = vmatpush.msra.mxu0 0.0
        %520 = vmatpush.msra.mxu0 0.0
        %521 = vmatpush.msra.mxu0 0.0
        %v522 = vand.u32 %v408, 4294901760
        %523 = vmatpush.msra.mxu0 %v522
        %v524 = vand.u32 %v407, 4294901760
        %525 = vmatpush.msra.mxu0 %v524
        %v526 = vand.u32 %v406, 4294901760
        %527 = vmatpush.msra.mxu0 %v526
        %v528 = vand.u32 %v405, 4294901760
        %529 = vmatpush.msra.mxu0 %v528
        %v530 = vand.u32 %v415, 4294901760
        %v531 = vsub.f32 %v415, %v530
        %v532 = vand.u32 %v531, 4294901760
        %v533 = vsub.f32 %v531, %v532
        %v534 = vand.u32 %v533, 4294901760
        %535 = vmatmul.f32.gmra.mxu0 %v534
        %v536 = vpop.f32.mrf.mxu0
        %v537 = vadd.f32 %v411, %v536
        %v538 = vand.u32 %v418, 4294901760
        %v539 = vsub.f32 %v418, %v538
        %v540 = vand.u32 %v539, 4294901760
        %v541 = vsub.f32 %v539, %v540
        %v542 = vand.u32 %v541, 4294901760
        %543 = vmatmul.f32.gmra.mxu0 %v542
        %v544 = vpop.f32.mrf.mxu0
        %v545 = vadd.f32 %v411, %v544
        %v546 = vand.u32 %v421, 4294901760
        %v547 = vsub.f32 %v421, %v546
        %v548 = vand.u32 %v547, 4294901760
        %v549 = vsub.f32 %v547, %v548
        %v550 = vand.u32 %v549, 4294901760
        %551 = vmatmul.f32.gmra.mxu0 %v550
        %v552 = vpop.f32.mrf.mxu0
        %v553 = vadd.f32 %v411, %v552
        %v554 = vand.u32 %v424, 4294901760
        %v555 = vsub.f32 %v424, %v554
        %v556 = vand.u32 %v555, 4294901760
        %v557 = vsub.f32 %v555, %v556
        %v558 = vand.u32 %v557, 4294901760
        %559 = vmatmul.f32.gmra.mxu0 %v558
        %v560 = vpop.f32.mrf.mxu0
        %v561 = vadd.f32 %v411, %v560
        %v562 = vand.u32 %v427, 4294901760
        %v563 = vsub.f32 %v427, %v562
        %v564 = vand.u32 %v563, 4294901760
        %v565 = vsub.f32 %v563, %v564
        %v566 = vand.u32 %v565, 4294901760
        %567 = vmatmul.f32.gmra.mxu0 %v566
        %v568 = vpop.f32.mrf.mxu0
        %v569 = vadd.f32 %v411, %v568
        %v570 = vand.u32 %v430, 4294901760
        %v571 = vsub.f32 %v430, %v570
        %v572 = vand.u32 %v571, 4294901760
        %v573 = vsub.f32 %v571, %v572
        %v574 = vand.u32 %v573, 4294901760
        %575 = vmatmul.f32.gmra.mxu0 %v574
        %v576 = vpop.f32.mrf.mxu0
        %v577 = vadd.f32 %v411, %v576
        %v578 = vand.u32 %v433, 4294901760
        %v579 = vsub.f32 %v433, %v578
        %v580 = vand.u32 %v579, 4294901760
        %v581 = vsub.f32 %v579, %v580
        %v582 = vand.u32 %v581, 4294901760
        %583 = vmatmul.f32.gmra.mxu0 %v582
        %v584 = vpop.f32.mrf.mxu0
        %v585 = vadd.f32 %v411, %v584
        %v586 = vand.u32 %v436, 4294901760
        %v587 = vsub.f32 %v436, %v586
        %v588 = vand.u32 %v587, 4294901760
        %v589 = vsub.f32 %v587, %v588
        %v590 = vand.u32 %v589, 4294901760
        %591 = vmatmul.f32.gmra.mxu0 %v590
        %v592 = vpop.f32.mrf.mxu0
        %v593 = vadd.f32 %v411, %v592
        %v594 = vand.u32 %v439, 4294901760
        %v595 = vsub.f32 %v439, %v594
        %v596 = vand.u32 %v595, 4294901760
        %v597 = vsub.f32 %v595, %v596
        %v598 = vand.u32 %v597, 4294901760
        %599 = vmatmul.f32.gmra.mxu0 %v598
        %v600 = vpop.f32.mrf.mxu0
        %v601 = vadd.f32 %v411, %v600
        %v602 = vand.u32 %v442, 4294901760
        %v603 = vsub.f32 %v442, %v602
        %v604 = vand.u32 %v603, 4294901760
        %v605 = vsub.f32 %v603, %v604
        %v606 = vand.u32 %v605, 4294901760
        %607 = vmatmul.f32.gmra.mxu0 %v606
        %v608 = vpop.f32.mrf.mxu0
        %v609 = vadd.f32 %v411, %v608
        %v610 = vand.u32 %v445, 4294901760
        %v611 = vsub.f32 %v445, %v610
        %v612 = vand.u32 %v611, 4294901760
        %v613 = vsub.f32 %v611, %v612
        %v614 = vand.u32 %v613, 4294901760
        %615 = vmatmul.f32.gmra.mxu0 %v614
        %v616 = vpop.f32.mrf.mxu0
        %v617 = vadd.f32 %v411, %v616
        %v618 = vand.u32 %v448, 4294901760
        %v619 = vsub.f32 %v448, %v618
        %v620 = vand.u32 %v619, 4294901760
        %v621 = vsub.f32 %v619, %v620
        %v622 = vand.u32 %v621, 4294901760
        %623 = vmatmul.f32.gmra.mxu0 %v622
        %v624 = vpop.f32.mrf.mxu0
        %v625 = vadd.f32 %v411, %v624
        %v626 = vand.u32 %v451, 4294901760
        %v627 = vsub.f32 %v451, %v626
        %v628 = vand.u32 %v627, 4294901760
        %v629 = vsub.f32 %v627, %v628
        %v630 = vand.u32 %v629, 4294901760
        %631 = vmatmul.f32.gmra.mxu0 %v630
        %v632 = vpop.f32.mrf.mxu0
        %v633 = vadd.f32 %v411, %v632
        %v634 = vand.u32 %v454, 4294901760
        %v635 = vsub.f32 %v454, %v634
        %v636 = vand.u32 %v635, 4294901760
        %v637 = vsub.f32 %v635, %v636
        %v638 = vand.u32 %v637, 4294901760
        %639 = vmatmul.f32.gmra.mxu0 %v638
        %v640 = vpop.f32.mrf.mxu0
        %v641 = vadd.f32 %v411, %v640
        %v642 = vand.u32 %v457, 4294901760
        %v643 = vsub.f32 %v457, %v642
        %v644 = vand.u32 %v643, 4294901760
        %v645 = vsub.f32 %v643, %v644
        %v646 = vand.u32 %v645, 4294901760
        %647 = vmatmul.f32.gmra.mxu0 %v646
        %v648 = vpop.f32.mrf.mxu0
        %v649 = vadd.f32 %v411, %v648
        %v650 = vand.u32 %v460, 4294901760
        %v651 = vsub.f32 %v460, %v650
        %v652 = vand.u32 %v651, 4294901760
        %v653 = vsub.f32 %v651, %v652
        %v654 = vand.u32 %v653, 4294901760
        %655 = vmatmul.f32.gmra.mxu0 %v654
        %v656 = vpop.f32.mrf.mxu0
        %v657 = vadd.f32 %v411, %v656
        %v658 = vand.u32 %v463, 4294901760
        %v659 = vsub.f32 %v463, %v658
        %v660 = vand.u32 %v659, 4294901760
        %v661 = vsub.f32 %v659, %v660
        %v662 = vand.u32 %v661, 4294901760
        %663 = vmatmul.f32.gmra.mxu0 %v662
        %v664 = vpop.f32.mrf.mxu0
        %v665 = vadd.f32 %v411, %v664
        %v666 = vand.u32 %v466, 4294901760
        %v667 = vsub.f32 %v466, %v666
        %v668 = vand.u32 %v667, 4294901760
        %v669 = vsub.f32 %v667, %v668
        %v670 = vand.u32 %v669, 4294901760
        %671 = vmatmul.f32.gmra.mxu0 %v670
        %v672 = vpop.f32.mrf.mxu0
        %v673 = vadd.f32 %v411, %v672
        %v674 = vand.u32 %v469, 4294901760
        %v675 = vsub.f32 %v469, %v674
        %v676 = vand.u32 %v675, 4294901760
        %v677 = vsub.f32 %v675, %v676
        %v678 = vand.u32 %v677, 4294901760
        %679 = vmatmul.f32.gmra.mxu0 %v678
        %v680 = vpop.f32.mrf.mxu0
        %v681 = vadd.f32 %v411, %v680
        %v682 = vand.u32 %v472, 4294901760
        %v683 = vsub.f32 %v472, %v682
        %v684 = vand.u32 %v683, 4294901760
        %v685 = vsub.f32 %v683, %v684
        %v686 = vand.u32 %v685, 4294901760
        %687 = vmatmul.f32.gmra.mxu0 %v686
        %v688 = vpop.f32.mrf.mxu0
        %v689 = vadd.f32 %v411, %v688
        %v690 = vand.u32 %v475, 4294901760
        %v691 = vsub.f32 %v475, %v690
        %v692 = vand.u32 %v691, 4294901760
        %v693 = vsub.f32 %v691, %v692
        %v694 = vand.u32 %v693, 4294901760
        %695 = vmatmul.f32.gmra.mxu0 %v694
        %v696 = vpop.f32.mrf.mxu0
        %v697 = vadd.f32 %v411, %v696
        %v698 = vand.u32 %v478, 4294901760
        %v699 = vsub.f32 %v478, %v698
        %v700 = vand.u32 %v699, 4294901760
        %v701 = vsub.f32 %v699, %v700
        %v702 = vand.u32 %v701, 4294901760
        %703 = vmatmul.f32.gmra.mxu0 %v702
        %v704 = vpop.f32.mrf.mxu0
        %v705 = vadd.f32 %v411, %v704
        %v706 = vand.u32 %v481, 4294901760
        %v707 = vsub.f32 %v481, %v706
        %v708 = vand.u32 %v707, 4294901760
        %v709 = vsub.f32 %v707, %v708
        %v710 = vand.u32 %v709, 4294901760
        %711 = vmatmul.f32.gmra.mxu0 %v710
        %v712 = vpop.f32.mrf.mxu0
        %v713 = vadd.f32 %v411, %v712
        %v714 = vand.u32 %v484, 4294901760
        %v715 = vsub.f32 %v484, %v714
        %v716 = vand.u32 %v715, 4294901760
        %v717 = vsub.f32 %v715, %v716
        %v718 = vand.u32 %v717, 4294901760
        %719 = vmatmul.f32.gmra.mxu0 %v718
        %v720 = vpop.f32.mrf.mxu0
        %v721 = vadd.f32 %v411, %v720
        %v722 = vand.u32 %v487, 4294901760
        %v723 = vsub.f32 %v487, %v722
        %v724 = vand.u32 %v723, 4294901760
        %v725 = vsub.f32 %v723, %v724
        %v726 = vand.u32 %v725, 4294901760
        %727 = vmatmul.f32.gmra.mxu0 %v726
        %v728 = vpop.f32.mrf.mxu0
        %v729 = vadd.f32 %v411, %v728
        %v730 = vand.u32 %v490, 4294901760
        %v731 = vsub.f32 %v490, %v730
        %v732 = vand.u32 %v731, 4294901760
        %v733 = vsub.f32 %v731, %v732
        %v734 = vand.u32 %v733, 4294901760
        %735 = vmatmul.f32.gmra.mxu0 %v734
        %v736 = vpop.f32.mrf.mxu0
        %v737 = vadd.f32 %v411, %v736
        %v738 = vand.u32 %v493, 4294901760
        %v739 = vsub.f32 %v493, %v738
        %v740 = vand.u32 %v739, 4294901760
        %v741 = vsub.f32 %v739, %v740
        %v742 = vand.u32 %v741, 4294901760
        %743 = vmatmul.f32.gmra.mxu0 %v742
        %v744 = vpop.f32.mrf.mxu0
        %v745 = vadd.f32 %v411, %v744
        %v746 = vand.u32 %v496, 4294901760
        %v747 = vsub.f32 %v496, %v746
        %v748 = vand.u32 %v747, 4294901760
        %v749 = vsub.f32 %v747, %v748
        %v750 = vand.u32 %v749, 4294901760
        %751 = vmatmul.f32.gmra.mxu0 %v750
        %v752 = vpop.f32.mrf.mxu0
        %v753 = vadd.f32 %v411, %v752
        %v754 = vand.u32 %v499, 4294901760
        %v755 = vsub.f32 %v499, %v754
        %v756 = vand.u32 %v755, 4294901760
        %v757 = vsub.f32 %v755, %v756
        %v758 = vand.u32 %v757, 4294901760
        %759 = vmatmul.f32.gmra.mxu0 %v758
        %v760 = vpop.f32.mrf.mxu0
        %v761 = vadd.f32 %v411, %v760
        %v762 = vand.u32 %v502, 4294901760
        %v763 = vsub.f32 %v502, %v762
        %v764 = vand.u32 %v763, 4294901760
        %v765 = vsub.f32 %v763, %v764
        %v766 = vand.u32 %v765, 4294901760
        %767 = vmatmul.f32.gmra.mxu0 %v766
        %v768 = vpop.f32.mrf.mxu0
        %v769 = vadd.f32 %v411, %v768
        %v770 = vand.u32 %v505, 4294901760
        %v771 = vsub.f32 %v505, %v770
        %v772 = vand.u32 %v771, 4294901760
        %v773 = vsub.f32 %v771, %v772
        %v774 = vand.u32 %v773, 4294901760
        %775 = vmatmul.f32.gmra.mxu0 %v774
        %v776 = vpop.f32.mrf.mxu0
        %v777 = vadd.f32 %v411, %v776
        %v778 = vand.u32 %v508, 4294901760
        %v779 = vsub.f32 %v508, %v778
        %v780 = vand.u32 %v779, 4294901760
        %v781 = vsub.f32 %v779, %v780
        %v782 = vand.u32 %v781, 4294901760
        %783 = vmatmul.f32.gmra.mxu0 %v782
        %v784 = vpop.f32.mrf.mxu0
        %v785 = vadd.f32 %v411, %v784
        %786 = vdwg.mxu0
        %787 = vmatpush.msra.mxu0 0.0
        %788 = vmatpush.msra.mxu0 0.0
        %789 = vmatpush.msra.mxu0 0.0
        %790 = vmatpush.msra.mxu0 0.0
        %791 = vmatpush.msra.mxu0 0.0
        %792 = vmatpush.msra.mxu0 0.0
        %793 = vmatpush.msra.mxu0 0.0
        %794 = vmatpush.msra.mxu0 0.0
        %795 = vmatpush.msra.mxu0 0.0
        %796 = vmatpush.msra.mxu0 0.0
        %797 = vmatpush.msra.mxu0 0.0
        %798 = vmatpush.msra.mxu0 0.0
        %v799 = vand.u32 %v408, 4294901760
        %v800 = vsub.f32 %v408, %v799
        %v801 = vand.u32 %v800, 4294901760
        %v802 = vsub.f32 %v800, %v801
        %v803 = vand.u32 %v802, 4294901760
        %804 = vmatpush.msra.mxu0 %v803
        %v805 = vand.u32 %v407, 4294901760
        %v806 = vsub.f32 %v407, %v805
        %v807 = vand.u32 %v806, 4294901760
        %v808 = vsub.f32 %v806, %v807
        %v809 = vand.u32 %v808, 4294901760
        %810 = vmatpush.msra.mxu0 %v809
        %v811 = vand.u32 %v406, 4294901760
        %v812 = vsub.f32 %v406, %v811
        %v813 = vand.u32 %v812, 4294901760
        %v814 = vsub.f32 %v812, %v813
        %v815 = vand.u32 %v814, 4294901760
        %816 = vmatpush.msra.mxu0 %v815
        %v817 = vand.u32 %v405, 4294901760
        %v818 = vsub.f32 %v405, %v817
        %v819 = vand.u32 %v818, 4294901760
        %v820 = vsub.f32 %v818, %v819
        %v821 = vand.u32 %v820, 4294901760
        %822 = vmatpush.msra.mxu0 %v821
        %v823 = vand.u32 %v415, 4294901760
        %824 = vmatmul.f32.gmra.mxu0 %v823
        %v825 = vpop.f32.mrf.mxu0
        %v826 = vadd.f32 %v537, %v825
        %v827 = vand.u32 %v418, 4294901760
        %828 = vmatmul.f32.gmra.mxu0 %v827
        %v829 = vpop.f32.mrf.mxu0
        %v830 = vadd.f32 %v545, %v829
        %v831 = vand.u32 %v421, 4294901760
        %832 = vmatmul.f32.gmra.mxu0 %v831
        %v833 = vpop.f32.mrf.mxu0
        %v834 = vadd.f32 %v553, %v833
        %v835 = vand.u32 %v424, 4294901760
        %836 = vmatmul.f32.gmra.mxu0 %v835
        %v837 = vpop.f32.mrf.mxu0
        %v838 = vadd.f32 %v561, %v837
        %v839 = vand.u32 %v427, 4294901760
        %840 = vmatmul.f32.gmra.mxu0 %v839
        %v841 = vpop.f32.mrf.mxu0
        %v842 = vadd.f32 %v569, %v841
        %v843 = vand.u32 %v430, 4294901760
        %844 = vmatmul.f32.gmra.mxu0 %v843
        %v845 = vpop.f32.mrf.mxu0
        %v846 = vadd.f32 %v577, %v845
        %v847 = vand.u32 %v433, 4294901760
        %848 = vmatmul.f32.gmra.mxu0 %v847
        %v849 = vpop.f32.mrf.mxu0
        %v850 = vadd.f32 %v585, %v849
        %v851 = vand.u32 %v436, 4294901760
        %852 = vmatmul.f32.gmra.mxu0 %v851
        %v853 = vpop.f32.mrf.mxu0
        %v854 = vadd.f32 %v593, %v853
        %v855 = vand.u32 %v439, 4294901760
        %856 = vmatmul.f32.gmra.mxu0 %v855
        %v857 = vpop.f32.mrf.mxu0
        %v858 = vadd.f32 %v601, %v857
        %v859 = vand.u32 %v442, 4294901760
        %860 = vmatmul.f32.gmra.mxu0 %v859
        %v861 = vpop.f32.mrf.mxu0
        %v862 = vadd.f32 %v609, %v861
        %v863 = vand.u32 %v445, 4294901760
        %864 = vmatmul.f32.gmra.mxu0 %v863
        %v865 = vpop.f32.mrf.mxu0
        %v866 = vadd.f32 %v617, %v865
        %v867 = vand.u32 %v448, 4294901760
        %868 = vmatmul.f32.gmra.mxu0 %v867
        %v869 = vpop.f32.mrf.mxu0
        %v870 = vadd.f32 %v625, %v869
        %v871 = vand.u32 %v451, 4294901760
        %872 = vmatmul.f32.gmra.mxu0 %v871
        %v873 = vpop.f32.mrf.mxu0
        %v874 = vadd.f32 %v633, %v873
        %v875 = vand.u32 %v454, 4294901760
        %876 = vmatmul.f32.gmra.mxu0 %v875
        %v877 = vpop.f32.mrf.mxu0
        %v878 = vadd.f32 %v641, %v877
        %v879 = vand.u32 %v457, 4294901760
        %880 = vmatmul.f32.gmra.mxu0 %v879
        %v881 = vpop.f32.mrf.mxu0
        %v882 = vadd.f32 %v649, %v881
        %v883 = vand.u32 %v460, 4294901760
        %884 = vmatmul.f32.gmra.mxu0 %v883
        %v885 = vpop.f32.mrf.mxu0
        %v886 = vadd.f32 %v657, %v885
        %v887 = vand.u32 %v463, 4294901760
        %888 = vmatmul.f32.gmra.mxu0 %v887
        %v889 = vpop.f32.mrf.mxu0
        %v890 = vadd.f32 %v665, %v889
        %v891 = vand.u32 %v466, 4294901760
        %892 = vmatmul.f32.gmra.mxu0 %v891
        %v893 = vpop.f32.mrf.mxu0
        %v894 = vadd.f32 %v673, %v893
        %v895 = vand.u32 %v469, 4294901760
        %896 = vmatmul.f32.gmra.mxu0 %v895
        %v897 = vpop.f32.mrf.mxu0
        %v898 = vadd.f32 %v681, %v897
        %v899 = vand.u32 %v472, 4294901760
        %900 = vmatmul.f32.gmra.mxu0 %v899
        %v901 = vpop.f32.mrf.mxu0
        %v902 = vadd.f32 %v689, %v901
        %v903 = vand.u32 %v475, 4294901760
        %904 = vmatmul.f32.gmra.mxu0 %v903
        %v905 = vpop.f32.mrf.mxu0
        %v906 = vadd.f32 %v697, %v905
        %v907 = vand.u32 %v478, 4294901760
        %908 = vmatmul.f32.gmra.mxu0 %v907
        %v909 = vpop.f32.mrf.mxu0
        %v910 = vadd.f32 %v705, %v909
        %v911 = vand.u32 %v481, 4294901760
        %912 = vmatmul.f32.gmra.mxu0 %v911
        %v913 = vpop.f32.mrf.mxu0
        %v914 = vadd.f32 %v713, %v913
        %v915 = vand.u32 %v484, 4294901760
        %916 = vmatmul.f32.gmra.mxu0 %v915
        %v917 = vpop.f32.mrf.mxu0
        %v918 = vadd.f32 %v721, %v917
        %v919 = vand.u32 %v487, 4294901760
        %920 = vmatmul.f32.gmra.mxu0 %v919
        %v921 = vpop.f32.mrf.mxu0
        %v922 = vadd.f32 %v729, %v921
        %v923 = vand.u32 %v490, 4294901760
        %924 = vmatmul.f32.gmra.mxu0 %v923
        %v925 = vpop.f32.mrf.mxu0
        %v926 = vadd.f32 %v737, %v925
        %v927 = vand.u32 %v493, 4294901760
        %928 = vmatmul.f32.gmra.mxu0 %v927
        %v929 = vpop.f32.mrf.mxu0
        %v930 = vadd.f32 %v745, %v929
        %v931 = vand.u32 %v496, 4294901760
        %932 = vmatmul.f32.gmra.mxu0 %v931
        %v933 = vpop.f32.mrf.mxu0
        %v934 = vadd.f32 %v753, %v933
        %v935 = vand.u32 %v499, 4294901760
        %936 = vmatmul.f32.gmra.mxu0 %v935
        %v937 = vpop.f32.mrf.mxu0
        %v938 = vadd.f32 %v761, %v937
        %v939 = vand.u32 %v502, 4294901760
        %940 = vmatmul.f32.gmra.mxu0 %v939
        %v941 = vpop.f32.mrf.mxu0
        %v942 = vadd.f32 %v769, %v941
        %v943 = vand.u32 %v505, 4294901760
        %944 = vmatmul.f32.gmra.mxu0 %v943
        %v945 = vpop.f32.mrf.mxu0
        %v946 = vadd.f32 %v777, %v945
        %v947 = vand.u32 %v508, 4294901760
        %948 = vmatmul.f32.gmra.mxu0 %v947
        %v949 = vpop.f32.mrf.mxu0
        %v950 = vadd.f32 %v785, %v949
        %951 = vdwg.mxu0
        %952 = vmatpush.msra.mxu0 0.0
        %953 = vmatpush.msra.mxu0 0.0
        %954 = vmatpush.msra.mxu0 0.0
        %955 = vmatpush.msra.mxu0 0.0
        %956 = vmatpush.msra.mxu0 0.0
        %957 = vmatpush.msra.mxu0 0.0
        %958 = vmatpush.msra.mxu0 0.0
        %959 = vmatpush.msra.mxu0 0.0
        %960 = vmatpush.msra.mxu0 0.0
        %961 = vmatpush.msra.mxu0 0.0
        %962 = vmatpush.msra.mxu0 0.0
        %963 = vmatpush.msra.mxu0 0.0
        %v964 = vand.u32 %v408, 4294901760
        %v965 = vsub.f32 %v408, %v964
        %966 = vmatpush.msra.mxu0 %v965
        %v967 = vand.u32 %v407, 4294901760
        %v968 = vsub.f32 %v407, %v967
        %969 = vmatpush.msra.mxu0 %v968
        %v970 = vand.u32 %v406, 4294901760
        %v971 = vsub.f32 %v406, %v970
        %972 = vmatpush.msra.mxu0 %v971
        %v973 = vand.u32 %v405, 4294901760
        %v974 = vsub.f32 %v405, %v973
        %975 = vmatpush.msra.mxu0 %v974
        %v976 = vand.u32 %v415, 4294901760
        %v977 = vsub.f32 %v415, %v976
        %978 = vmatmul.f32.gmra.mxu0 %v977
        %v979 = vpop.f32.mrf.mxu0
        %v980 = vadd.f32 %v826, %v979
        %v981 = vand.u32 %v418, 4294901760
        %v982 = vsub.f32 %v418, %v981
        %983 = vmatmul.f32.gmra.mxu0 %v982
        %v984 = vpop.f32.mrf.mxu0
        %v985 = vadd.f32 %v830, %v984
        %v986 = vand.u32 %v421, 4294901760
        %v987 = vsub.f32 %v421, %v986
        %988 = vmatmul.f32.gmra.mxu0 %v987
        %v989 = vpop.f32.mrf.mxu0
        %v990 = vadd.f32 %v834, %v989
        %v991 = vand.u32 %v424, 4294901760
        %v992 = vsub.f32 %v424, %v991
        %993 = vmatmul.f32.gmra.mxu0 %v992
        %v994 = vpop.f32.mrf.mxu0
        %v995 = vadd.f32 %v838, %v994
        %v996 = vand.u32 %v427, 4294901760
        %v997 = vsub.f32 %v427, %v996
        %998 = vmatmul.f32.gmra.mxu0 %v997
        %v999 = vpop.f32.mrf.mxu0
        %v1000 = vadd.f32 %v842, %v999
        %v1001 = vand.u32 %v430, 4294901760
        %v1002 = vsub.f32 %v430, %v1001
        %1003 = vmatmul.f32.gmra.mxu0 %v1002
        %v1004 = vpop.f32.mrf.mxu0
        %v1005 = vadd.f32 %v846, %v1004
        %v1006 = vand.u32 %v433, 4294901760
        %v1007 = vsub.f32 %v433, %v1006
        %1008 = vmatmul.f32.gmra.mxu0 %v1007
        %v1009 = vpop.f32.mrf.mxu0
        %v1010 = vadd.f32 %v850, %v1009
        %v1011 = vand.u32 %v436, 4294901760
        %v1012 = vsub.f32 %v436, %v1011
        %1013 = vmatmul.f32.gmra.mxu0 %v1012
        %v1014 = vpop.f32.mrf.mxu0
        %v1015 = vadd.f32 %v854, %v1014
        %v1016 = vand.u32 %v439, 4294901760
        %v1017 = vsub.f32 %v439, %v1016
        %1018 = vmatmul.f32.gmra.mxu0 %v1017
        %v1019 = vpop.f32.mrf.mxu0
        %v1020 = vadd.f32 %v858, %v1019
        %v1021 = vand.u32 %v442, 4294901760
        %v1022 = vsub.f32 %v442, %v1021
        %1023 = vmatmul.f32.gmra.mxu0 %v1022
        %v1024 = vpop.f32.mrf.mxu0
        %v1025 = vadd.f32 %v862, %v1024
        %v1026 = vand.u32 %v445, 4294901760
        %v1027 = vsub.f32 %v445, %v1026
        %1028 = vmatmul.f32.gmra.mxu0 %v1027
        %v1029 = vpop.f32.mrf.mxu0
        %v1030 = vadd.f32 %v866, %v1029
        %v1031 = vand.u32 %v448, 4294901760
        %v1032 = vsub.f32 %v448, %v1031
        %1033 = vmatmul.f32.gmra.mxu0 %v1032
        %v1034 = vpop.f32.mrf.mxu0
        %v1035 = vadd.f32 %v870, %v1034
        %v1036 = vand.u32 %v451, 4294901760
        %v1037 = vsub.f32 %v451, %v1036
        %1038 = vmatmul.f32.gmra.mxu0 %v1037
        %v1039 = vpop.f32.mrf.mxu0
        %v1040 = vadd.f32 %v874, %v1039
        %v1041 = vand.u32 %v454, 4294901760
        %v1042 = vsub.f32 %v454, %v1041
        %1043 = vmatmul.f32.gmra.mxu0 %v1042
        %v1044 = vpop.f32.mrf.mxu0
        %v1045 = vadd.f32 %v878, %v1044
        %v1046 = vand.u32 %v457, 4294901760
        %v1047 = vsub.f32 %v457, %v1046
        %1048 = vmatmul.f32.gmra.mxu0 %v1047
        %v1049 = vpop.f32.mrf.mxu0
        %v1050 = vadd.f32 %v882, %v1049
        %v1051 = vand.u32 %v460, 4294901760
        %v1052 = vsub.f32 %v460, %v1051
        %1053 = vmatmul.f32.gmra.mxu0 %v1052
        %v1054 = vpop.f32.mrf.mxu0
        %v1055 = vadd.f32 %v886, %v1054
        %v1056 = vand.u32 %v463, 4294901760
        %v1057 = vsub.f32 %v463, %v1056
        %1058 = vmatmul.f32.gmra.mxu0 %v1057
        %v1059 = vpop.f32.mrf.mxu0
        %v1060 = vadd.f32 %v890, %v1059
        %v1061 = vand.u32 %v466, 4294901760
        %v1062 = vsub.f32 %v466, %v1061
        %1063 = vmatmul.f32.gmra.mxu0 %v1062
        %v1064 = vpop.f32.mrf.mxu0
        %v1065 = vadd.f32 %v894, %v1064
        %v1066 = vand.u32 %v469, 4294901760
        %v1067 = vsub.f32 %v469, %v1066
        %1068 = vmatmul.f32.gmra.mxu0 %v1067
        %v1069 = vpop.f32.mrf.mxu0
        %v1070 = vadd.f32 %v898, %v1069
        %v1071 = vand.u32 %v472, 4294901760
        %v1072 = vsub.f32 %v472, %v1071
        %1073 = vmatmul.f32.gmra.mxu0 %v1072
        %v1074 = vpop.f32.mrf.mxu0
        %v1075 = vadd.f32 %v902, %v1074
        %v1076 = vand.u32 %v475, 4294901760
        %v1077 = vsub.f32 %v475, %v1076
        %1078 = vmatmul.f32.gmra.mxu0 %v1077
        %v1079 = vpop.f32.mrf.mxu0
        %v1080 = vadd.f32 %v906, %v1079
        %v1081 = vand.u32 %v478, 4294901760
        %v1082 = vsub.f32 %v478, %v1081
        %1083 = vmatmul.f32.gmra.mxu0 %v1082
        %v1084 = vpop.f32.mrf.mxu0
        %v1085 = vadd.f32 %v910, %v1084
        %v1086 = vand.u32 %v481, 4294901760
        %v1087 = vsub.f32 %v481, %v1086
        %1088 = vmatmul.f32.gmra.mxu0 %v1087
        %v1089 = vpop.f32.mrf.mxu0
        %v1090 = vadd.f32 %v914, %v1089
        %v1091 = vand.u32 %v484, 4294901760
        %v1092 = vsub.f32 %v484, %v1091
        %1093 = vmatmul.f32.gmra.mxu0 %v1092
        %v1094 = vpop.f32.mrf.mxu0
        %v1095 = vadd.f32 %v918, %v1094
        %v1096 = vand.u32 %v487, 4294901760
        %v1097 = vsub.f32 %v487, %v1096
        %1098 = vmatmul.f32.gmra.mxu0 %v1097
        %v1099 = vpop.f32.mrf.mxu0
        %v1100 = vadd.f32 %v922, %v1099
        %v1101 = vand.u32 %v490, 4294901760
        %v1102 = vsub.f32 %v490, %v1101
        %1103 = vmatmul.f32.gmra.mxu0 %v1102
        %v1104 = vpop.f32.mrf.mxu0
        %v1105 = vadd.f32 %v926, %v1104
        %v1106 = vand.u32 %v493, 4294901760
        %v1107 = vsub.f32 %v493, %v1106
        %1108 = vmatmul.f32.gmra.mxu0 %v1107
        %v1109 = vpop.f32.mrf.mxu0
        %v1110 = vadd.f32 %v930, %v1109
        %v1111 = vand.u32 %v496, 4294901760
        %v1112 = vsub.f32 %v496, %v1111
        %1113 = vmatmul.f32.gmra.mxu0 %v1112
        %v1114 = vpop.f32.mrf.mxu0
        %v1115 = vadd.f32 %v934, %v1114
        %v1116 = vand.u32 %v499, 4294901760
        %v1117 = vsub.f32 %v499, %v1116
        %1118 = vmatmul.f32.gmra.mxu0 %v1117
        %v1119 = vpop.f32.mrf.mxu0
        %v1120 = vadd.f32 %v938, %v1119
        %v1121 = vand.u32 %v502, 4294901760
        %v1122 = vsub.f32 %v502, %v1121
        %1123 = vmatmul.f32.gmra.mxu0 %v1122
        %v1124 = vpop.f32.mrf.mxu0
        %v1125 = vadd.f32 %v942, %v1124
        %v1126 = vand.u32 %v505, 4294901760
        %v1127 = vsub.f32 %v505, %v1126
        %1128 = vmatmul.f32.gmra.mxu0 %v1127
        %v1129 = vpop.f32.mrf.mxu0
        %v1130 = vadd.f32 %v946, %v1129
        %v1131 = vand.u32 %v508, 4294901760
        %v1132 = vsub.f32 %v508, %v1131
        %1133 = vmatmul.f32.gmra.mxu0 %v1132
        %v1134 = vpop.f32.mrf.mxu0
        %v1135 = vadd.f32 %v950, %v1134
        %1136 = vdwg.mxu0
        %1137 = vmatpush.msra.mxu0 0.0
        %1138 = vmatpush.msra.mxu0 0.0
        %1139 = vmatpush.msra.mxu0 0.0
        %1140 = vmatpush.msra.mxu0 0.0
        %1141 = vmatpush.msra.mxu0 0.0
        %1142 = vmatpush.msra.mxu0 0.0
        %1143 = vmatpush.msra.mxu0 0.0
        %1144 = vmatpush.msra.mxu0 0.0
        %1145 = vmatpush.msra.mxu0 0.0
        %1146 = vmatpush.msra.mxu0 0.0
        %1147 = vmatpush.msra.mxu0 0.0
        %1148 = vmatpush.msra.mxu0 0.0
        %v1149 = vand.u32 %v408, 4294901760
        %1150 = vmatpush.msra.mxu0 %v1149
        %v1151 = vand.u32 %v407, 4294901760
        %1152 = vmatpush.msra.mxu0 %v1151
        %v1153 = vand.u32 %v406, 4294901760
        %1154 = vmatpush.msra.mxu0 %v1153
        %v1155 = vand.u32 %v405, 4294901760
        %1156 = vmatpush.msra.mxu0 %v1155
        %v1157 = vand.u32 %v415, 4294901760
        %v1158 = vsub.f32 %v415, %v1157
        %v1159 = vand.u32 %v1158, 4294901760
        %1160 = vmatmul.f32.gmra.mxu0 %v1159
        %v1161 = vpop.f32.mrf.mxu0
        %v1162 = vadd.f32 %v980, %v1161
        %v1163 = vand.u32 %v418, 4294901760
        %v1164 = vsub.f32 %v418, %v1163
        %v1165 = vand.u32 %v1164, 4294901760
        %1166 = vmatmul.f32.gmra.mxu0 %v1165
        %v1167 = vpop.f32.mrf.mxu0
        %v1168 = vadd.f32 %v985, %v1167
        %v1169 = vand.u32 %v421, 4294901760
        %v1170 = vsub.f32 %v421, %v1169
        %v1171 = vand.u32 %v1170, 4294901760
        %1172 = vmatmul.f32.gmra.mxu0 %v1171
        %v1173 = vpop.f32.mrf.mxu0
        %v1174 = vadd.f32 %v990, %v1173
        %v1175 = vand.u32 %v424, 4294901760
        %v1176 = vsub.f32 %v424, %v1175
        %v1177 = vand.u32 %v1176, 4294901760
        %1178 = vmatmul.f32.gmra.mxu0 %v1177
        %v1179 = vpop.f32.mrf.mxu0
        %v1180 = vadd.f32 %v995, %v1179
        %v1181 = vand.u32 %v427, 4294901760
        %v1182 = vsub.f32 %v427, %v1181
        %v1183 = vand.u32 %v1182, 4294901760
        %1184 = vmatmul.f32.gmra.mxu0 %v1183
        %v1185 = vpop.f32.mrf.mxu0
        %v1186 = vadd.f32 %v1000, %v1185
        %v1187 = vand.u32 %v430, 4294901760
        %v1188 = vsub.f32 %v430, %v1187
        %v1189 = vand.u32 %v1188, 4294901760
        %1190 = vmatmul.f32.gmra.mxu0 %v1189
        %v1191 = vpop.f32.mrf.mxu0
        %v1192 = vadd.f32 %v1005, %v1191
        %v1193 = vand.u32 %v433, 4294901760
        %v1194 = vsub.f32 %v433, %v1193
        %v1195 = vand.u32 %v1194, 4294901760
        %1196 = vmatmul.f32.gmra.mxu0 %v1195
        %v1197 = vpop.f32.mrf.mxu0
        %v1198 = vadd.f32 %v1010, %v1197
        %v1199 = vand.u32 %v436, 4294901760
        %v1200 = vsub.f32 %v436, %v1199
        %v1201 = vand.u32 %v1200, 4294901760
        %1202 = vmatmul.f32.gmra.mxu0 %v1201
        %v1203 = vpop.f32.mrf.mxu0
        %v1204 = vadd.f32 %v1015, %v1203
        %v1205 = vand.u32 %v439, 4294901760
        %v1206 = vsub.f32 %v439, %v1205
        %v1207 = vand.u32 %v1206, 4294901760
        %1208 = vmatmul.f32.gmra.mxu0 %v1207
        %v1209 = vpop.f32.mrf.mxu0
        %v1210 = vadd.f32 %v1020, %v1209
        %v1211 = vand.u32 %v442, 4294901760
        %v1212 = vsub.f32 %v442, %v1211
        %v1213 = vand.u32 %v1212, 4294901760
        %1214 = vmatmul.f32.gmra.mxu0 %v1213
        %v1215 = vpop.f32.mrf.mxu0
        %v1216 = vadd.f32 %v1025, %v1215
        %v1217 = vand.u32 %v445, 4294901760
        %v1218 = vsub.f32 %v445, %v1217
        %v1219 = vand.u32 %v1218, 4294901760
        %1220 = vmatmul.f32.gmra.mxu0 %v1219
        %v1221 = vpop.f32.mrf.mxu0
        %v1222 = vadd.f32 %v1030, %v1221
        %v1223 = vand.u32 %v448, 4294901760
        %v1224 = vsub.f32 %v448, %v1223
        %v1225 = vand.u32 %v1224, 4294901760
        %1226 = vmatmul.f32.gmra.mxu0 %v1225
        %v1227 = vpop.f32.mrf.mxu0
        %v1228 = vadd.f32 %v1035, %v1227
        %v1229 = vand.u32 %v451, 4294901760
        %v1230 = vsub.f32 %v451, %v1229
        %v1231 = vand.u32 %v1230, 4294901760
        %1232 = vmatmul.f32.gmra.mxu0 %v1231
        %v1233 = vpop.f32.mrf.mxu0
        %v1234 = vadd.f32 %v1040, %v1233
        %v1235 = vand.u32 %v454, 4294901760
        %v1236 = vsub.f32 %v454, %v1235
        %v1237 = vand.u32 %v1236, 4294901760
        %1238 = vmatmul.f32.gmra.mxu0 %v1237
        %v1239 = vpop.f32.mrf.mxu0
        %v1240 = vadd.f32 %v1045, %v1239
        %v1241 = vand.u32 %v457, 4294901760
        %v1242 = vsub.f32 %v457, %v1241
        %v1243 = vand.u32 %v1242, 4294901760
        %1244 = vmatmul.f32.gmra.mxu0 %v1243
        %v1245 = vpop.f32.mrf.mxu0
        %v1246 = vadd.f32 %v1050, %v1245
        %v1247 = vand.u32 %v460, 4294901760
        %v1248 = vsub.f32 %v460, %v1247
        %v1249 = vand.u32 %v1248, 4294901760
        %1250 = vmatmul.f32.gmra.mxu0 %v1249
        %v1251 = vpop.f32.mrf.mxu0
        %v1252 = vadd.f32 %v1055, %v1251
        %v1253 = vand.u32 %v463, 4294901760
        %v1254 = vsub.f32 %v463, %v1253
        %v1255 = vand.u32 %v1254, 4294901760
        %1256 = vmatmul.f32.gmra.mxu0 %v1255
        %v1257 = vpop.f32.mrf.mxu0
        %v1258 = vadd.f32 %v1060, %v1257
        %v1259 = vand.u32 %v466, 4294901760
        %v1260 = vsub.f32 %v466, %v1259
        %v1261 = vand.u32 %v1260, 4294901760
        %1262 = vmatmul.f32.gmra.mxu0 %v1261
        %v1263 = vpop.f32.mrf.mxu0
        %v1264 = vadd.f32 %v1065, %v1263
        %v1265 = vand.u32 %v469, 4294901760
        %v1266 = vsub.f32 %v469, %v1265
        %v1267 = vand.u32 %v1266, 4294901760
        %1268 = vmatmul.f32.gmra.mxu0 %v1267
        %v1269 = vpop.f32.mrf.mxu0
        %v1270 = vadd.f32 %v1070, %v1269
        %v1271 = vand.u32 %v472, 4294901760
        %v1272 = vsub.f32 %v472, %v1271
        %v1273 = vand.u32 %v1272, 4294901760
        %1274 = vmatmul.f32.gmra.mxu0 %v1273
        %v1275 = vpop.f32.mrf.mxu0
        %v1276 = vadd.f32 %v1075, %v1275
        %v1277 = vand.u32 %v475, 4294901760
        %v1278 = vsub.f32 %v475, %v1277
        %v1279 = vand.u32 %v1278, 4294901760
        %1280 = vmatmul.f32.gmra.mxu0 %v1279
        %v1281 = vpop.f32.mrf.mxu0
        %v1282 = vadd.f32 %v1080, %v1281
        %v1283 = vand.u32 %v478, 4294901760
        %v1284 = vsub.f32 %v478, %v1283
        %v1285 = vand.u32 %v1284, 4294901760
        %1286 = vmatmul.f32.gmra.mxu0 %v1285
        %v1287 = vpop.f32.mrf.mxu0
        %v1288 = vadd.f32 %v1085, %v1287
        %v1289 = vand.u32 %v481, 4294901760
        %v1290 = vsub.f32 %v481, %v1289
        %v1291 = vand.u32 %v1290, 4294901760
        %1292 = vmatmul.f32.gmra.mxu0 %v1291
        %v1293 = vpop.f32.mrf.mxu0
        %v1294 = vadd.f32 %v1090, %v1293
        %v1295 = vand.u32 %v484, 4294901760
        %v1296 = vsub.f32 %v484, %v1295
        %v1297 = vand.u32 %v1296, 4294901760
        %1298 = vmatmul.f32.gmra.mxu0 %v1297
        %v1299 = vpop.f32.mrf.mxu0
        %v1300 = vadd.f32 %v1095, %v1299
        %v1301 = vand.u32 %v487, 4294901760
        %v1302 = vsub.f32 %v487, %v1301
        %v1303 = vand.u32 %v1302, 4294901760
        %1304 = vmatmul.f32.gmra.mxu0 %v1303
        %v1305 = vpop.f32.mrf.mxu0
        %v1306 = vadd.f32 %v1100, %v1305
        %v1307 = vand.u32 %v490, 4294901760
        %v1308 = vsub.f32 %v490, %v1307
        %v1309 = vand.u32 %v1308, 4294901760
        %1310 = vmatmul.f32.gmra.mxu0 %v1309
        %v1311 = vpop.f32.mrf.mxu0
        %v1312 = vadd.f32 %v1105, %v1311
        %v1313 = vand.u32 %v493, 4294901760
        %v1314 = vsub.f32 %v493, %v1313
        %v1315 = vand.u32 %v1314, 4294901760
        %1316 = vmatmul.f32.gmra.mxu0 %v1315
        %v1317 = vpop.f32.mrf.mxu0
        %v1318 = vadd.f32 %v1110, %v1317
        %v1319 = vand.u32 %v496, 4294901760
        %v1320 = vsub.f32 %v496, %v1319
        %v1321 = vand.u32 %v1320, 4294901760
        %1322 = vmatmul.f32.gmra.mxu0 %v1321
        %v1323 = vpop.f32.mrf.mxu0
        %v1324 = vadd.f32 %v1115, %v1323
        %v1325 = vand.u32 %v499, 4294901760
        %v1326 = vsub.f32 %v499, %v1325
        %v1327 = vand.u32 %v1326, 4294901760
        %1328 = vmatmul.f32.gmra.mxu0 %v1327
        %v1329 = vpop.f32.mrf.mxu0
        %v1330 = vadd.f32 %v1120, %v1329
        %v1331 = vand.u32 %v502, 4294901760
        %v1332 = vsub.f32 %v502, %v1331
        %v1333 = vand.u32 %v1332, 4294901760
        %1334 = vmatmul.f32.gmra.mxu0 %v1333
        %v1335 = vpop.f32.mrf.mxu0
        %v1336 = vadd.f32 %v1125, %v1335
        %v1337 = vand.u32 %v505, 4294901760
        %v1338 = vsub.f32 %v505, %v1337
        %v1339 = vand.u32 %v1338, 4294901760
        %1340 = vmatmul.f32.gmra.mxu0 %v1339
        %v1341 = vpop.f32.mrf.mxu0
        %v1342 = vadd.f32 %v1130, %v1341
        %v1343 = vand.u32 %v508, 4294901760
        %v1344 = vsub.f32 %v508, %v1343
        %v1345 = vand.u32 %v1344, 4294901760
        %1346 = vmatmul.f32.gmra.mxu0 %v1345
        %v1347 = vpop.f32.mrf.mxu0
        %v1348 = vadd.f32 %v1135, %v1347
        %1349 = vdwg.mxu0
        %1350 = vmatpush.msra.mxu0 0.0
        %1351 = vmatpush.msra.mxu0 0.0
        %1352 = vmatpush.msra.mxu0 0.0
        %1353 = vmatpush.msra.mxu0 0.0
        %1354 = vmatpush.msra.mxu0 0.0
        %1355 = vmatpush.msra.mxu0 0.0
        %1356 = vmatpush.msra.mxu0 0.0
        %1357 = vmatpush.msra.mxu0 0.0
        %1358 = vmatpush.msra.mxu0 0.0
        %1359 = vmatpush.msra.mxu0 0.0
        %1360 = vmatpush.msra.mxu0 0.0
        %1361 = vmatpush.msra.mxu0 0.0
        %v1362 = vand.u32 %v408, 4294901760
        %v1363 = vsub.f32 %v408, %v1362
        %v1364 = vand.u32 %v1363, 4294901760
        %1365 = vmatpush.msra.mxu0 %v1364
        %v1366 = vand.u32 %v407, 4294901760
        %v1367 = vsub.f32 %v407, %v1366
        %v1368 = vand.u32 %v1367, 4294901760
        %1369 = vmatpush.msra.mxu0 %v1368
        %v1370 = vand.u32 %v406, 4294901760
        %v1371 = vsub.f32 %v406, %v1370
        %v1372 = vand.u32 %v1371, 4294901760
        %1373 = vmatpush.msra.mxu0 %v1372
        %v1374 = vand.u32 %v405, 4294901760
        %v1375 = vsub.f32 %v405, %v1374
        %v1376 = vand.u32 %v1375, 4294901760
        %1377 = vmatpush.msra.mxu0 %v1376
        %v1378 = vand.u32 %v415, 4294901760
        %1379 = vmatmul.f32.gmra.mxu0 %v1378
        %v1380 = vpop.f32.mrf.mxu0
        %v1381 = vadd.f32 %v1162, %v1380
        %v1382 = vand.u32 %v418, 4294901760
        %1383 = vmatmul.f32.gmra.mxu0 %v1382
        %v1384 = vpop.f32.mrf.mxu0
        %v1385 = vadd.f32 %v1168, %v1384
        %v1386 = vand.u32 %v421, 4294901760
        %1387 = vmatmul.f32.gmra.mxu0 %v1386
        %v1388 = vpop.f32.mrf.mxu0
        %v1389 = vadd.f32 %v1174, %v1388
        %v1390 = vand.u32 %v424, 4294901760
        %1391 = vmatmul.f32.gmra.mxu0 %v1390
        %v1392 = vpop.f32.mrf.mxu0
        %v1393 = vadd.f32 %v1180, %v1392
        %v1394 = vand.u32 %v427, 4294901760
        %1395 = vmatmul.f32.gmra.mxu0 %v1394
        %v1396 = vpop.f32.mrf.mxu0
        %v1397 = vadd.f32 %v1186, %v1396
        %v1398 = vand.u32 %v430, 4294901760
        %1399 = vmatmul.f32.gmra.mxu0 %v1398
        %v1400 = vpop.f32.mrf.mxu0
        %v1401 = vadd.f32 %v1192, %v1400
        %v1402 = vand.u32 %v433, 4294901760
        %1403 = vmatmul.f32.gmra.mxu0 %v1402
        %v1404 = vpop.f32.mrf.mxu0
        %v1405 = vadd.f32 %v1198, %v1404
        %v1406 = vand.u32 %v436, 4294901760
        %1407 = vmatmul.f32.gmra.mxu0 %v1406
        %v1408 = vpop.f32.mrf.mxu0
        %v1409 = vadd.f32 %v1204, %v1408
        %v1410 = vand.u32 %v439, 4294901760
        %1411 = vmatmul.f32.gmra.mxu0 %v1410
        %v1412 = vpop.f32.mrf.mxu0
        %v1413 = vadd.f32 %v1210, %v1412
        %v1414 = vand.u32 %v442, 4294901760
        %1415 = vmatmul.f32.gmra.mxu0 %v1414
        %v1416 = vpop.f32.mrf.mxu0
        %v1417 = vadd.f32 %v1216, %v1416
        %v1418 = vand.u32 %v445, 4294901760
        %1419 = vmatmul.f32.gmra.mxu0 %v1418
        %v1420 = vpop.f32.mrf.mxu0
        %v1421 = vadd.f32 %v1222, %v1420
        %v1422 = vand.u32 %v448, 4294901760
        %1423 = vmatmul.f32.gmra.mxu0 %v1422
        %v1424 = vpop.f32.mrf.mxu0
        %v1425 = vadd.f32 %v1228, %v1424
        %v1426 = vand.u32 %v451, 4294901760
        %1427 = vmatmul.f32.gmra.mxu0 %v1426
        %v1428 = vpop.f32.mrf.mxu0
        %v1429 = vadd.f32 %v1234, %v1428
        %v1430 = vand.u32 %v454, 4294901760
        %1431 = vmatmul.f32.gmra.mxu0 %v1430
        %v1432 = vpop.f32.mrf.mxu0
        %v1433 = vadd.f32 %v1240, %v1432
        %v1434 = vand.u32 %v457, 4294901760
        %1435 = vmatmul.f32.gmra.mxu0 %v1434
        %v1436 = vpop.f32.mrf.mxu0
        %v1437 = vadd.f32 %v1246, %v1436
        %v1438 = vand.u32 %v460, 4294901760
        %1439 = vmatmul.f32.gmra.mxu0 %v1438
        %v1440 = vpop.f32.mrf.mxu0
        %v1441 = vadd.f32 %v1252, %v1440
        %v1442 = vand.u32 %v463, 4294901760
        %1443 = vmatmul.f32.gmra.mxu0 %v1442
        %v1444 = vpop.f32.mrf.mxu0
        %v1445 = vadd.f32 %v1258, %v1444
        %v1446 = vand.u32 %v466, 4294901760
        %1447 = vmatmul.f32.gmra.mxu0 %v1446
        %v1448 = vpop.f32.mrf.mxu0
        %v1449 = vadd.f32 %v1264, %v1448
        %v1450 = vand.u32 %v469, 4294901760
        %1451 = vmatmul.f32.gmra.mxu0 %v1450
        %v1452 = vpop.f32.mrf.mxu0
        %v1453 = vadd.f32 %v1270, %v1452
        %v1454 = vand.u32 %v472, 4294901760
        %1455 = vmatmul.f32.gmra.mxu0 %v1454
        %v1456 = vpop.f32.mrf.mxu0
        %v1457 = vadd.f32 %v1276, %v1456
        %v1458 = vand.u32 %v475, 4294901760
        %1459 = vmatmul.f32.gmra.mxu0 %v1458
        %v1460 = vpop.f32.mrf.mxu0
        %v1461 = vadd.f32 %v1282, %v1460
        %v1462 = vand.u32 %v478, 4294901760
        %1463 = vmatmul.f32.gmra.mxu0 %v1462
        %v1464 = vpop.f32.mrf.mxu0
        %v1465 = vadd.f32 %v1288, %v1464
        %v1466 = vand.u32 %v481, 4294901760
        %1467 = vmatmul.f32.gmra.mxu0 %v1466
        %v1468 = vpop.f32.mrf.mxu0
        %v1469 = vadd.f32 %v1294, %v1468
        %v1470 = vand.u32 %v484, 4294901760
        %1471 = vmatmul.f32.gmra.mxu0 %v1470
        %v1472 = vpop.f32.mrf.mxu0
        %v1473 = vadd.f32 %v1300, %v1472
        %v1474 = vand.u32 %v487, 4294901760
        %1475 = vmatmul.f32.gmra.mxu0 %v1474
        %v1476 = vpop.f32.mrf.mxu0
        %v1477 = vadd.f32 %v1306, %v1476
        %v1478 = vand.u32 %v490, 4294901760
        %1479 = vmatmul.f32.gmra.mxu0 %v1478
        %v1480 = vpop.f32.mrf.mxu0
        %v1481 = vadd.f32 %v1312, %v1480
        %v1482 = vand.u32 %v493, 4294901760
        %1483 = vmatmul.f32.gmra.mxu0 %v1482
        %v1484 = vpop.f32.mrf.mxu0
        %v1485 = vadd.f32 %v1318, %v1484
        %v1486 = vand.u32 %v496, 4294901760
        %1487 = vmatmul.f32.gmra.mxu0 %v1486
        %v1488 = vpop.f32.mrf.mxu0
        %v1489 = vadd.f32 %v1324, %v1488
        %v1490 = vand.u32 %v499, 4294901760
        %1491 = vmatmul.f32.gmra.mxu0 %v1490
        %v1492 = vpop.f32.mrf.mxu0
        %v1493 = vadd.f32 %v1330, %v1492
        %v1494 = vand.u32 %v502, 4294901760
        %1495 = vmatmul.f32.gmra.mxu0 %v1494
        %v1496 = vpop.f32.mrf.mxu0
        %v1497 = vadd.f32 %v1336, %v1496
        %v1498 = vand.u32 %v505, 4294901760
        %1499 = vmatmul.f32.gmra.mxu0 %v1498
        %v1500 = vpop.f32.mrf.mxu0
        %v1501 = vadd.f32 %v1342, %v1500
        %v1502 = vand.u32 %v508, 4294901760
        %1503 = vmatmul.f32.gmra.mxu0 %v1502
        %v1504 = vpop.f32.mrf.mxu0
        %v1505 = vadd.f32 %v1348, %v1504
        %1506 = vdwg.mxu0
        %1507 = vmatpush.msra.mxu0 0.0
        %1508 = vmatpush.msra.mxu0 0.0
        %1509 = vmatpush.msra.mxu0 0.0
        %1510 = vmatpush.msra.mxu0 0.0
        %1511 = vmatpush.msra.mxu0 0.0
        %1512 = vmatpush.msra.mxu0 0.0
        %1513 = vmatpush.msra.mxu0 0.0
        %1514 = vmatpush.msra.mxu0 0.0
        %1515 = vmatpush.msra.mxu0 0.0
        %1516 = vmatpush.msra.mxu0 0.0
        %1517 = vmatpush.msra.mxu0 0.0
        %1518 = vmatpush.msra.mxu0 0.0
        %v1519 = vand.u32 %v408, 4294901760
        %1520 = vmatpush.msra.mxu0 %v1519
        %v1521 = vand.u32 %v407, 4294901760
        %1522 = vmatpush.msra.mxu0 %v1521
        %v1523 = vand.u32 %v406, 4294901760
        %1524 = vmatpush.msra.mxu0 %v1523
        %v1525 = vand.u32 %v405, 4294901760
        %1526 = vmatpush.msra.mxu0 %v1525
        %v1527 = vand.u32 %v415, 4294901760
        %1528 = vmatmul.f32.gmra.mxu0 %v1527
        %v1529 = vpop.f32.mrf.mxu0
        %v1530 = vadd.f32 %v1381, %v1529
        %v1531 = vand.u32 %v418, 4294901760
        %1532 = vmatmul.f32.gmra.mxu0 %v1531
        %v1533 = vpop.f32.mrf.mxu0
        %v1534 = vadd.f32 %v1385, %v1533
        %v1535 = vand.u32 %v421, 4294901760
        %1536 = vmatmul.f32.gmra.mxu0 %v1535
        %v1537 = vpop.f32.mrf.mxu0
        %v1538 = vadd.f32 %v1389, %v1537
        %v1539 = vand.u32 %v424, 4294901760
        %1540 = vmatmul.f32.gmra.mxu0 %v1539
        %v1541 = vpop.f32.mrf.mxu0
        %v1542 = vadd.f32 %v1393, %v1541
        %v1543 = vand.u32 %v427, 4294901760
        %1544 = vmatmul.f32.gmra.mxu0 %v1543
        %v1545 = vpop.f32.mrf.mxu0
        %v1546 = vadd.f32 %v1397, %v1545
        %v1547 = vand.u32 %v430, 4294901760
        %1548 = vmatmul.f32.gmra.mxu0 %v1547
        %v1549 = vpop.f32.mrf.mxu0
        %v1550 = vadd.f32 %v1401, %v1549
        %v1551 = vand.u32 %v433, 4294901760
        %1552 = vmatmul.f32.gmra.mxu0 %v1551
        %v1553 = vpop.f32.mrf.mxu0
        %v1554 = vadd.f32 %v1405, %v1553
        %v1555 = vand.u32 %v436, 4294901760
        %1556 = vmatmul.f32.gmra.mxu0 %v1555
        %v1557 = vpop.f32.mrf.mxu0
        %v1558 = vadd.f32 %v1409, %v1557
        %v1559 = vand.u32 %v439, 4294901760
        %1560 = vmatmul.f32.gmra.mxu0 %v1559
        %v1561 = vpop.f32.mrf.mxu0
        %v1562 = vadd.f32 %v1413, %v1561
        %v1563 = vand.u32 %v442, 4294901760
        %1564 = vmatmul.f32.gmra.mxu0 %v1563
        %v1565 = vpop.f32.mrf.mxu0
        %v1566 = vadd.f32 %v1417, %v1565
        %v1567 = vand.u32 %v445, 4294901760
        %1568 = vmatmul.f32.gmra.mxu0 %v1567
        %v1569 = vpop.f32.mrf.mxu0
        %v1570 = vadd.f32 %v1421, %v1569
        %v1571 = vand.u32 %v448, 4294901760
        %1572 = vmatmul.f32.gmra.mxu0 %v1571
        %v1573 = vpop.f32.mrf.mxu0
        %v1574 = vadd.f32 %v1425, %v1573
        %v1575 = vand.u32 %v451, 4294901760
        %1576 = vmatmul.f32.gmra.mxu0 %v1575
        %v1577 = vpop.f32.mrf.mxu0
        %v1578 = vadd.f32 %v1429, %v1577
        %v1579 = vand.u32 %v454, 4294901760
        %1580 = vmatmul.f32.gmra.mxu0 %v1579
        %v1581 = vpop.f32.mrf.mxu0
        %v1582 = vadd.f32 %v1433, %v1581
        %v1583 = vand.u32 %v457, 4294901760
        %1584 = vmatmul.f32.gmra.mxu0 %v1583
        %v1585 = vpop.f32.mrf.mxu0
        %v1586 = vadd.f32 %v1437, %v1585
        %v1587 = vand.u32 %v460, 4294901760
        %1588 = vmatmul.f32.gmra.mxu0 %v1587
        %v1589 = vpop.f32.mrf.mxu0
        %v1590 = vadd.f32 %v1441, %v1589
        %v1591 = vand.u32 %v463, 4294901760
        %1592 = vmatmul.f32.gmra.mxu0 %v1591
        %v1593 = vpop.f32.mrf.mxu0
        %v1594 = vadd.f32 %v1445, %v1593
        %v1595 = vand.u32 %v466, 4294901760
        %1596 = vmatmul.f32.gmra.mxu0 %v1595
        %v1597 = vpop.f32.mrf.mxu0
        %v1598 = vadd.f32 %v1449, %v1597
        %v1599 = vand.u32 %v469, 4294901760
        %1600 = vmatmul.f32.gmra.mxu0 %v1599
        %v1601 = vpop.f32.mrf.mxu0
        %v1602 = vadd.f32 %v1453, %v1601
        %v1603 = vand.u32 %v472, 4294901760
        %1604 = vmatmul.f32.gmra.mxu0 %v1603
        %v1605 = vpop.f32.mrf.mxu0
        %v1606 = vadd.f32 %v1457, %v1605
        %v1607 = vand.u32 %v475, 4294901760
        %1608 = vmatmul.f32.gmra.mxu0 %v1607
        %v1609 = vpop.f32.mrf.mxu0
        %v1610 = vadd.f32 %v1461, %v1609
        %v1611 = vand.u32 %v478, 4294901760
        %1612 = vmatmul.f32.gmra.mxu0 %v1611
        %v1613 = vpop.f32.mrf.mxu0
        %v1614 = vadd.f32 %v1465, %v1613
        %v1615 = vand.u32 %v481, 4294901760
        %1616 = vmatmul.f32.gmra.mxu0 %v1615
        %v1617 = vpop.f32.mrf.mxu0
        %v1618 = vadd.f32 %v1469, %v1617
        %v1619 = vand.u32 %v484, 4294901760
        %1620 = vmatmul.f32.gmra.mxu0 %v1619
        %v1621 = vpop.f32.mrf.mxu0
        %v1622 = vadd.f32 %v1473, %v1621
        %v1623 = vand.u32 %v487, 4294901760
        %1624 = vmatmul.f32.gmra.mxu0 %v1623
        %v1625 = vpop.f32.mrf.mxu0
        %v1626 = vadd.f32 %v1477, %v1625
        %v1627 = vand.u32 %v490, 4294901760
        %1628 = vmatmul.f32.gmra.mxu0 %v1627
        %v1629 = vpop.f32.mrf.mxu0
        %v1630 = vadd.f32 %v1481, %v1629
        %v1631 = vand.u32 %v493, 4294901760
        %1632 = vmatmul.f32.gmra.mxu0 %v1631
        %v1633 = vpop.f32.mrf.mxu0
        %v1634 = vadd.f32 %v1485, %v1633
        %v1635 = vand.u32 %v496, 4294901760
        %1636 = vmatmul.f32.gmra.mxu0 %v1635
        %v1637 = vpop.f32.mrf.mxu0
        %v1638 = vadd.f32 %v1489, %v1637
        %v1639 = vand.u32 %v499, 4294901760
        %1640 = vmatmul.f32.gmra.mxu0 %v1639
        %v1641 = vpop.f32.mrf.mxu0
        %v1642 = vadd.f32 %v1493, %v1641
        %v1643 = vand.u32 %v502, 4294901760
        %1644 = vmatmul.f32.gmra.mxu0 %v1643
        %v1645 = vpop.f32.mrf.mxu0
        %v1646 = vadd.f32 %v1497, %v1645
        %v1647 = vand.u32 %v505, 4294901760
        %1648 = vmatmul.f32.gmra.mxu0 %v1647
        %v1649 = vpop.f32.mrf.mxu0
        %v1650 = vadd.f32 %v1501, %v1649
        %v1651 = vand.u32 %v508, 4294901760
        %1652 = vmatmul.f32.gmra.mxu0 %v1651
        %v1653 = vpop.f32.mrf.mxu0
        %v1654 = vadd.f32 %v1505, %v1653
        %1655 = vdwg.mxu0
        %1656 = vst.msk [vmem:[%s364] sm:$0xff] %vm413, %v1530
        %1657 = vst.msk [vmem:[%s364 + $0x8] sm:$0xff] %vm413, %v1534
        %1658 = vst.msk [vmem:[%s364 + $0x10] sm:$0xff] %vm413, %v1538
        %1659 = vst.msk [vmem:[%s364 + $0x18] sm:$0xff] %vm413, %v1542
        %1660 = vst.msk [vmem:[%s364 + $0x20] sm:$0xff] %vm413, %v1546
        %1661 = vst.msk [vmem:[%s364 + $0x28] sm:$0xff] %vm413, %v1550
        %1662 = vst.msk [vmem:[%s364 + $0x30] sm:$0xff] %vm413, %v1554
        %1663 = vst.msk [vmem:[%s364 + $0x38] sm:$0xff] %vm413, %v1558
        %1664 = vst.msk [vmem:[%s364 + $0x40] sm:$0xff] %vm413, %v1562
        %1665 = vst.msk [vmem:[%s364 + $0x48] sm:$0xff] %vm413, %v1566
        %1666 = vst.msk [vmem:[%s364 + $0x50] sm:$0xff] %vm413, %v1570
        %1667 = vst.msk [vmem:[%s364 + $0x58] sm:$0xff] %vm413, %v1574
        %1668 = vst.msk [vmem:[%s364 + $0x60] sm:$0xff] %vm413, %v1578
        %1669 = vst.msk [vmem:[%s364 + $0x68] sm:$0xff] %vm413, %v1582
        %1670 = vst.msk [vmem:[%s364 + $0x70] sm:$0xff] %vm413, %v1586
        %1671 = vst.msk [vmem:[%s364 + $0x78] sm:$0xff] %vm413, %v1590
        %1672 = vst.msk [vmem:[%s364 + $0x80] sm:$0xff] %vm413, %v1594
        %1673 = vst.msk [vmem:[%s364 + $0x88] sm:$0xff] %vm413, %v1598
        %1674 = vst.msk [vmem:[%s364 + $0x90] sm:$0xff] %vm413, %v1602
        %1675 = vst.msk [vmem:[%s364 + $0x98] sm:$0xff] %vm413, %v1606
        %1676 = vst.msk [vmem:[%s364 + $0xa0] sm:$0xff] %vm413, %v1610
        %1677 = vst.msk [vmem:[%s364 + $0xa8] sm:$0xff] %vm413, %v1614
        %1678 = vst.msk [vmem:[%s364 + $0xb0] sm:$0xff] %vm413, %v1618
        %1679 = vst.msk [vmem:[%s364 + $0xb8] sm:$0xff] %vm413, %v1622
        %1680 = vst.msk [vmem:[%s364 + $0xc0] sm:$0xff] %vm413, %v1626
        %1681 = vst.msk [vmem:[%s364 + $0xc8] sm:$0xff] %vm413, %v1630
        %1682 = vst.msk [vmem:[%s364 + $0xd0] sm:$0xff] %vm413, %v1634
        %1683 = vst.msk [vmem:[%s364 + $0xd8] sm:$0xff] %vm413, %v1638
        %1684 = vst.msk [vmem:[%s364 + $0xe0] sm:$0xff] %vm413, %v1642
        %1685 = vst.msk [vmem:[%s364 + $0xe8] sm:$0xff] %vm413, %v1646
        %1686 = vst.msk [vmem:[%s364 + $0xf0] sm:$0xff] %vm413, %v1650
        %1687 = vst.msk [vmem:[%s364 + $0xf8] sm:$0xff] %vm413, %v1654
        %v1688 = vld [vmem:[%s354] sm:$0xff]
        %v1689 = vld [vmem:[%s354 + $0x8] sm:$0xff]
        %v1690 = vld [vmem:[%s354 + $0x10] sm:$0xff]
        %v1691 = vld [vmem:[%s354 + $0x18] sm:$0xff]
        %v1692 = vld [vmem:[%s359] sm:$0xff]
        %v1693 = vld [vmem:[%s359 + $0x8] sm:$0xff]
        %v1694 = vld [vmem:[%s359 + $0x10] sm:$0xff]
        %v1695 = vld [vmem:[%s359 + $0x18] sm:$0xff]
        %1697 = vset.pattern.permute.xlu0 0
        %1698 = vperm.xlu0 %1697, %v1692
        %v1699 = vpop.permute.xlu0 %1698
        %1702 = vset.pattern.permute.xlu0 0
        %1703 = vperm.xlu0 %1702, %v1693
        %v1704 = vpop.permute.xlu0 %1703
        %1707 = vset.pattern.permute.xlu0 0
        %1708 = vperm.xlu0 %1707, %v1694
        %v1709 = vpop.permute.xlu0 %1708
        %1712 = vset.pattern.permute.xlu0 0
        %1713 = vperm.xlu0 %1712, %v1695
        %v1714 = vpop.permute.xlu0 %1713
        %v1717 = vsel %vm413, %v1688, 0
        %v1720 = vsel %vm413, %v1689, 0
        %v1723 = vsel %vm413, %v1690, 0
        %v1726 = vsel %vm413, %v1691, 0
        %1728 = vmatpush.msra.mxu0 0.0
        %1729 = vmatpush.msra.mxu0 0.0
        %1730 = vmatpush.msra.mxu0 0.0
        %1731 = vmatpush.msra.mxu0 0.0
        %1732 = vmatpush.msra.mxu0 0.0
        %1733 = vmatpush.msra.mxu0 0.0
        %1734 = vmatpush.msra.mxu0 0.0
        %1735 = vmatpush.msra.mxu0 0.0
        %1736 = vmatpush.msra.mxu0 0.0
        %1737 = vmatpush.msra.mxu0 0.0
        %1738 = vmatpush.msra.mxu0 0.0
        %1739 = vmatpush.msra.mxu0 0.0
        %v1740 = vand.u32 %v403, 4294901760
        %1741 = vmatpush.msra.mxu0 %v1740
        %v1742 = vand.u32 %v401, 4294901760
        %1743 = vmatpush.msra.mxu0 %v1742
        %v1744 = vand.u32 %v399, 4294901760
        %1745 = vmatpush.msra.mxu0 %v1744
        %v1746 = vand.u32 %v397, 4294901760
        %1747 = vmatpush.msra.mxu0 %v1746
        %v1748 = vand.u32 %v1717, 4294901760
        %v1749 = vsub.f32 %v1717, %v1748
        %v1750 = vand.u32 %v1749, 4294901760
        %v1751 = vsub.f32 %v1749, %v1750
        %v1752 = vand.u32 %v1751, 4294901760
        %1753 = vmatmul.f32.gmra.mxu0 %v1752
        %v1754 = vpop.f32.mrf.mxu0
        %v1755 = vadd.f32 %v1699, %v1754
        %v1756 = vand.u32 %v1720, 4294901760
        %v1757 = vsub.f32 %v1720, %v1756
        %v1758 = vand.u32 %v1757, 4294901760
        %v1759 = vsub.f32 %v1757, %v1758
        %v1760 = vand.u32 %v1759, 4294901760
        %1761 = vmatmul.f32.gmra.mxu0 %v1760
        %v1762 = vpop.f32.mrf.mxu0
        %v1763 = vadd.f32 %v1704, %v1762
        %v1764 = vand.u32 %v1723, 4294901760
        %v1765 = vsub.f32 %v1723, %v1764
        %v1766 = vand.u32 %v1765, 4294901760
        %v1767 = vsub.f32 %v1765, %v1766
        %v1768 = vand.u32 %v1767, 4294901760
        %1769 = vmatmul.f32.gmra.mxu0 %v1768
        %v1770 = vpop.f32.mrf.mxu0
        %v1771 = vadd.f32 %v1709, %v1770
        %v1772 = vand.u32 %v1726, 4294901760
        %v1773 = vsub.f32 %v1726, %v1772
        %v1774 = vand.u32 %v1773, 4294901760
        %v1775 = vsub.f32 %v1773, %v1774
        %v1776 = vand.u32 %v1775, 4294901760
        %1777 = vmatmul.f32.gmra.mxu0 %v1776
        %v1778 = vpop.f32.mrf.mxu0
        %v1779 = vadd.f32 %v1714, %v1778
        %1780 = vdwg.mxu0
        %1781 = vmatpush.msra.mxu0 0.0
        %1782 = vmatpush.msra.mxu0 0.0
        %1783 = vmatpush.msra.mxu0 0.0
        %1784 = vmatpush.msra.mxu0 0.0
        %1785 = vmatpush.msra.mxu0 0.0
        %1786 = vmatpush.msra.mxu0 0.0
        %1787 = vmatpush.msra.mxu0 0.0
        %1788 = vmatpush.msra.mxu0 0.0
        %1789 = vmatpush.msra.mxu0 0.0
        %1790 = vmatpush.msra.mxu0 0.0
        %1791 = vmatpush.msra.mxu0 0.0
        %1792 = vmatpush.msra.mxu0 0.0
        %v1793 = vand.u32 %v403, 4294901760
        %v1794 = vsub.f32 %v403, %v1793
        %v1795 = vand.u32 %v1794, 4294901760
        %v1796 = vsub.f32 %v1794, %v1795
        %v1797 = vand.u32 %v1796, 4294901760
        %1798 = vmatpush.msra.mxu0 %v1797
        %v1799 = vand.u32 %v401, 4294901760
        %v1800 = vsub.f32 %v401, %v1799
        %v1801 = vand.u32 %v1800, 4294901760
        %v1802 = vsub.f32 %v1800, %v1801
        %v1803 = vand.u32 %v1802, 4294901760
        %1804 = vmatpush.msra.mxu0 %v1803
        %v1805 = vand.u32 %v399, 4294901760
        %v1806 = vsub.f32 %v399, %v1805
        %v1807 = vand.u32 %v1806, 4294901760
        %v1808 = vsub.f32 %v1806, %v1807
        %v1809 = vand.u32 %v1808, 4294901760
        %1810 = vmatpush.msra.mxu0 %v1809
        %v1811 = vand.u32 %v397, 4294901760
        %v1812 = vsub.f32 %v397, %v1811
        %v1813 = vand.u32 %v1812, 4294901760
        %v1814 = vsub.f32 %v1812, %v1813
        %v1815 = vand.u32 %v1814, 4294901760
        %1816 = vmatpush.msra.mxu0 %v1815
        %v1817 = vand.u32 %v1717, 4294901760
        %1818 = vmatmul.f32.gmra.mxu0 %v1817
        %v1819 = vpop.f32.mrf.mxu0
        %v1820 = vadd.f32 %v1755, %v1819
        %v1821 = vand.u32 %v1720, 4294901760
        %1822 = vmatmul.f32.gmra.mxu0 %v1821
        %v1823 = vpop.f32.mrf.mxu0
        %v1824 = vadd.f32 %v1763, %v1823
        %v1825 = vand.u32 %v1723, 4294901760
        %1826 = vmatmul.f32.gmra.mxu0 %v1825
        %v1827 = vpop.f32.mrf.mxu0
        %v1828 = vadd.f32 %v1771, %v1827
        %v1829 = vand.u32 %v1726, 4294901760
        %1830 = vmatmul.f32.gmra.mxu0 %v1829
        %v1831 = vpop.f32.mrf.mxu0
        %v1832 = vadd.f32 %v1779, %v1831
        %1833 = vdwg.mxu0
        %1834 = vmatpush.msra.mxu0 0.0
        %1835 = vmatpush.msra.mxu0 0.0
        %1836 = vmatpush.msra.mxu0 0.0
        %1837 = vmatpush.msra.mxu0 0.0
        %1838 = vmatpush.msra.mxu0 0.0
        %1839 = vmatpush.msra.mxu0 0.0
        %1840 = vmatpush.msra.mxu0 0.0
        %1841 = vmatpush.msra.mxu0 0.0
        %1842 = vmatpush.msra.mxu0 0.0
        %1843 = vmatpush.msra.mxu0 0.0
        %1844 = vmatpush.msra.mxu0 0.0
        %1845 = vmatpush.msra.mxu0 0.0
        %v1846 = vand.u32 %v403, 4294901760
        %v1847 = vsub.f32 %v403, %v1846
        %1848 = vmatpush.msra.mxu0 %v1847
        %v1849 = vand.u32 %v401, 4294901760
        %v1850 = vsub.f32 %v401, %v1849
        %1851 = vmatpush.msra.mxu0 %v1850
        %v1852 = vand.u32 %v399, 4294901760
        %v1853 = vsub.f32 %v399, %v1852
        %1854 = vmatpush.msra.mxu0 %v1853
        %v1855 = vand.u32 %v397, 4294901760
        %v1856 = vsub.f32 %v397, %v1855
        %1857 = vmatpush.msra.mxu0 %v1856
        %v1858 = vand.u32 %v1717, 4294901760
        %v1859 = vsub.f32 %v1717, %v1858
        %1860 = vmatmul.f32.gmra.mxu0 %v1859
        %v1861 = vpop.f32.mrf.mxu0
        %v1862 = vadd.f32 %v1820, %v1861
        %v1863 = vand.u32 %v1720, 4294901760
        %v1864 = vsub.f32 %v1720, %v1863
        %1865 = vmatmul.f32.gmra.mxu0 %v1864
        %v1866 = vpop.f32.mrf.mxu0
        %v1867 = vadd.f32 %v1824, %v1866
        %v1868 = vand.u32 %v1723, 4294901760
        %v1869 = vsub.f32 %v1723, %v1868
        %1870 = vmatmul.f32.gmra.mxu0 %v1869
        %v1871 = vpop.f32.mrf.mxu0
        %v1872 = vadd.f32 %v1828, %v1871
        %v1873 = vand.u32 %v1726, 4294901760
        %v1874 = vsub.f32 %v1726, %v1873
        %1875 = vmatmul.f32.gmra.mxu0 %v1874
        %v1876 = vpop.f32.mrf.mxu0
        %v1877 = vadd.f32 %v1832, %v1876
        %1878 = vdwg.mxu0
        %1879 = vmatpush.msra.mxu0 0.0
        %1880 = vmatpush.msra.mxu0 0.0
        %1881 = vmatpush.msra.mxu0 0.0
        %1882 = vmatpush.msra.mxu0 0.0
        %1883 = vmatpush.msra.mxu0 0.0
        %1884 = vmatpush.msra.mxu0 0.0
        %1885 = vmatpush.msra.mxu0 0.0
        %1886 = vmatpush.msra.mxu0 0.0
        %1887 = vmatpush.msra.mxu0 0.0
        %1888 = vmatpush.msra.mxu0 0.0
        %1889 = vmatpush.msra.mxu0 0.0
        %1890 = vmatpush.msra.mxu0 0.0
        %v1891 = vand.u32 %v403, 4294901760
        %1892 = vmatpush.msra.mxu0 %v1891
        %v1893 = vand.u32 %v401, 4294901760
        %1894 = vmatpush.msra.mxu0 %v1893
        %v1895 = vand.u32 %v399, 4294901760
        %1896 = vmatpush.msra.mxu0 %v1895
        %v1897 = vand.u32 %v397, 4294901760
        %1898 = vmatpush.msra.mxu0 %v1897
        %v1899 = vand.u32 %v1717, 4294901760
        %v1900 = vsub.f32 %v1717, %v1899
        %v1901 = vand.u32 %v1900, 4294901760
        %1902 = vmatmul.f32.gmra.mxu0 %v1901
        %v1903 = vpop.f32.mrf.mxu0
        %v1904 = vadd.f32 %v1862, %v1903
        %v1905 = vand.u32 %v1720, 4294901760
        %v1906 = vsub.f32 %v1720, %v1905
        %v1907 = vand.u32 %v1906, 4294901760
        %1908 = vmatmul.f32.gmra.mxu0 %v1907
        %v1909 = vpop.f32.mrf.mxu0
        %v1910 = vadd.f32 %v1867, %v1909
        %v1911 = vand.u32 %v1723, 4294901760
        %v1912 = vsub.f32 %v1723, %v1911
        %v1913 = vand.u32 %v1912, 4294901760
        %1914 = vmatmul.f32.gmra.mxu0 %v1913
        %v1915 = vpop.f32.mrf.mxu0
        %v1916 = vadd.f32 %v1872, %v1915
        %v1917 = vand.u32 %v1726, 4294901760
        %v1918 = vsub.f32 %v1726, %v1917
        %v1919 = vand.u32 %v1918, 4294901760
        %1920 = vmatmul.f32.gmra.mxu0 %v1919
        %v1921 = vpop.f32.mrf.mxu0
        %v1922 = vadd.f32 %v1877, %v1921
        %1923 = vdwg.mxu0
        %1924 = vmatpush.msra.mxu0 0.0
        %1925 = vmatpush.msra.mxu0 0.0
        %1926 = vmatpush.msra.mxu0 0.0
        %1927 = vmatpush.msra.mxu0 0.0
        %1928 = vmatpush.msra.mxu0 0.0
        %1929 = vmatpush.msra.mxu0 0.0
        %1930 = vmatpush.msra.mxu0 0.0
        %1931 = vmatpush.msra.mxu0 0.0
        %1932 = vmatpush.msra.mxu0 0.0
        %1933 = vmatpush.msra.mxu0 0.0
        %1934 = vmatpush.msra.mxu0 0.0
        %1935 = vmatpush.msra.mxu0 0.0
        %v1936 = vand.u32 %v403, 4294901760
        %v1937 = vsub.f32 %v403, %v1936
        %v1938 = vand.u32 %v1937, 4294901760
        %1939 = vmatpush.msra.mxu0 %v1938
        %v1940 = vand.u32 %v401, 4294901760
        %v1941 = vsub.f32 %v401, %v1940
        %v1942 = vand.u32 %v1941, 4294901760
        %1943 = vmatpush.msra.mxu0 %v1942
        %v1944 = vand.u32 %v399, 4294901760
        %v1945 = vsub.f32 %v399, %v1944
        %v1946 = vand.u32 %v1945, 4294901760
        %1947 = vmatpush.msra.mxu0 %v1946
        %v1948 = vand.u32 %v397, 4294901760
        %v1949 = vsub.f32 %v397, %v1948
        %v1950 = vand.u32 %v1949, 4294901760
        %1951 = vmatpush.msra.mxu0 %v1950
        %v1952 = vand.u32 %v1717, 4294901760
        %1953 = vmatmul.f32.gmra.mxu0 %v1952
        %v1954 = vpop.f32.mrf.mxu0
        %v1955 = vadd.f32 %v1904, %v1954
        %v1956 = vand.u32 %v1720, 4294901760
        %1957 = vmatmul.f32.gmra.mxu0 %v1956
        %v1958 = vpop.f32.mrf.mxu0
        %v1959 = vadd.f32 %v1910, %v1958
        %v1960 = vand.u32 %v1723, 4294901760
        %1961 = vmatmul.f32.gmra.mxu0 %v1960
        %v1962 = vpop.f32.mrf.mxu0
        %v1963 = vadd.f32 %v1916, %v1962
        %v1964 = vand.u32 %v1726, 4294901760
        %1965 = vmatmul.f32.gmra.mxu0 %v1964
        %v1966 = vpop.f32.mrf.mxu0
        %v1967 = vadd.f32 %v1922, %v1966
        %1968 = vdwg.mxu0
        %1969 = vmatpush.msra.mxu0 0.0
        %1970 = vmatpush.msra.mxu0 0.0
        %1971 = vmatpush.msra.mxu0 0.0
        %1972 = vmatpush.msra.mxu0 0.0
        %1973 = vmatpush.msra.mxu0 0.0
        %1974 = vmatpush.msra.mxu0 0.0
        %1975 = vmatpush.msra.mxu0 0.0
        %1976 = vmatpush.msra.mxu0 0.0
        %1977 = vmatpush.msra.mxu0 0.0
        %1978 = vmatpush.msra.mxu0 0.0
        %1979 = vmatpush.msra.mxu0 0.0
        %1980 = vmatpush.msra.mxu0 0.0
        %v1981 = vand.u32 %v403, 4294901760
        %1982 = vmatpush.msra.mxu0 %v1981
        %v1983 = vand.u32 %v401, 4294901760
        %1984 = vmatpush.msra.mxu0 %v1983
        %v1985 = vand.u32 %v399, 4294901760
        %1986 = vmatpush.msra.mxu0 %v1985
        %v1987 = vand.u32 %v397, 4294901760
        %1988 = vmatpush.msra.mxu0 %v1987
        %v1989 = vand.u32 %v1717, 4294901760
        %1990 = vmatmul.f32.gmra.mxu0 %v1989
        %v1991 = vpop.f32.mrf.mxu0
        %v1992 = vadd.f32 %v1955, %v1991
        %v1993 = vand.u32 %v1720, 4294901760
        %1994 = vmatmul.f32.gmra.mxu0 %v1993
        %v1995 = vpop.f32.mrf.mxu0
        %v1996 = vadd.f32 %v1959, %v1995
        %v1997 = vand.u32 %v1723, 4294901760
        %1998 = vmatmul.f32.gmra.mxu0 %v1997
        %v1999 = vpop.f32.mrf.mxu0
        %v2000 = vadd.f32 %v1963, %v1999
        %v2001 = vand.u32 %v1726, 4294901760
        %2002 = vmatmul.f32.gmra.mxu0 %v2001
        %v2003 = vpop.f32.mrf.mxu0
        %v2004 = vadd.f32 %v1967, %v2003
        %2005 = vdwg.mxu0
        %2006 = vmatpush.msra.mxu0 0.0
        %2007 = vmatpush.msra.mxu0 0.0
        %2008 = vmatpush.msra.mxu0 0.0
        %2009 = vmatpush.msra.mxu0 0.0
        %2010 = vmatpush.msra.mxu0 0.0
        %2011 = vmatpush.msra.mxu0 0.0
        %2012 = vmatpush.msra.mxu0 0.0
        %2013 = vmatpush.msra.mxu0 0.0
        %2014 = vmatpush.msra.mxu0 0.0
        %2015 = vmatpush.msra.mxu0 0.0
        %2016 = vmatpush.msra.mxu0 0.0
        %2017 = vmatpush.msra.mxu0 0.0
        %v2018 = vand.u32 %v404, 4294901760
        %2019 = vmatpush.msra.mxu0 %v2018
        %v2020 = vand.u32 %v402, 4294901760
        %2021 = vmatpush.msra.mxu0 %v2020
        %v2022 = vand.u32 %v400, 4294901760
        %2023 = vmatpush.msra.mxu0 %v2022
        %v2024 = vand.u32 %v398, 4294901760
        %2025 = vmatpush.msra.mxu0 %v2024
        %v2026 = vand.u32 %v1717, 4294901760
        %v2027 = vsub.f32 %v1717, %v2026
        %v2028 = vand.u32 %v2027, 4294901760
        %v2029 = vsub.f32 %v2027, %v2028
        %v2030 = vand.u32 %v2029, 4294901760
        %2031 = vmatmul.f32.gmra.mxu0 %v2030
        %v2032 = vpop.f32.mrf.mxu0
        %v2033 = vadd.f32 %v1699, %v2032
        %v2034 = vand.u32 %v1720, 4294901760
        %v2035 = vsub.f32 %v1720, %v2034
        %v2036 = vand.u32 %v2035, 4294901760
        %v2037 = vsub.f32 %v2035, %v2036
        %v2038 = vand.u32 %v2037, 4294901760
        %2039 = vmatmul.f32.gmra.mxu0 %v2038
        %v2040 = vpop.f32.mrf.mxu0
        %v2041 = vadd.f32 %v1704, %v2040
        %v2042 = vand.u32 %v1723, 4294901760
        %v2043 = vsub.f32 %v1723, %v2042
        %v2044 = vand.u32 %v2043, 4294901760
        %v2045 = vsub.f32 %v2043, %v2044
        %v2046 = vand.u32 %v2045, 4294901760
        %2047 = vmatmul.f32.gmra.mxu0 %v2046
        %v2048 = vpop.f32.mrf.mxu0
        %v2049 = vadd.f32 %v1709, %v2048
        %v2050 = vand.u32 %v1726, 4294901760
        %v2051 = vsub.f32 %v1726, %v2050
        %v2052 = vand.u32 %v2051, 4294901760
        %v2053 = vsub.f32 %v2051, %v2052
        %v2054 = vand.u32 %v2053, 4294901760
        %2055 = vmatmul.f32.gmra.mxu0 %v2054
        %v2056 = vpop.f32.mrf.mxu0
        %v2057 = vadd.f32 %v1714, %v2056
        %2058 = vdwg.mxu0
        %2059 = vmatpush.msra.mxu0 0.0
        %2060 = vmatpush.msra.mxu0 0.0
        %2061 = vmatpush.msra.mxu0 0.0
        %2062 = vmatpush.msra.mxu0 0.0
        %2063 = vmatpush.msra.mxu0 0.0
        %2064 = vmatpush.msra.mxu0 0.0
        %2065 = vmatpush.msra.mxu0 0.0
        %2066 = vmatpush.msra.mxu0 0.0
        %2067 = vmatpush.msra.mxu0 0.0
        %2068 = vmatpush.msra.mxu0 0.0
        %2069 = vmatpush.msra.mxu0 0.0
        %2070 = vmatpush.msra.mxu0 0.0
        %v2071 = vand.u32 %v404, 4294901760
        %v2072 = vsub.f32 %v404, %v2071
        %v2073 = vand.u32 %v2072, 4294901760
        %v2074 = vsub.f32 %v2072, %v2073
        %v2075 = vand.u32 %v2074, 4294901760
        %2076 = vmatpush.msra.mxu0 %v2075
        %v2077 = vand.u32 %v402, 4294901760
        %v2078 = vsub.f32 %v402, %v2077
        %v2079 = vand.u32 %v2078, 4294901760
        %v2080 = vsub.f32 %v2078, %v2079
        %v2081 = vand.u32 %v2080, 4294901760
        %2082 = vmatpush.msra.mxu0 %v2081
        %v2083 = vand.u32 %v400, 4294901760
        %v2084 = vsub.f32 %v400, %v2083
        %v2085 = vand.u32 %v2084, 4294901760
        %v2086 = vsub.f32 %v2084, %v2085
        %v2087 = vand.u32 %v2086, 4294901760
        %2088 = vmatpush.msra.mxu0 %v2087
        %v2089 = vand.u32 %v398, 4294901760
        %v2090 = vsub.f32 %v398, %v2089
        %v2091 = vand.u32 %v2090, 4294901760
        %v2092 = vsub.f32 %v2090, %v2091
        %v2093 = vand.u32 %v2092, 4294901760
        %2094 = vmatpush.msra.mxu0 %v2093
        %v2095 = vand.u32 %v1717, 4294901760
        %2096 = vmatmul.f32.gmra.mxu0 %v2095
        %v2097 = vpop.f32.mrf.mxu0
        %v2098 = vadd.f32 %v2033, %v2097
        %v2099 = vand.u32 %v1720, 4294901760
        %2100 = vmatmul.f32.gmra.mxu0 %v2099
        %v2101 = vpop.f32.mrf.mxu0
        %v2102 = vadd.f32 %v2041, %v2101
        %v2103 = vand.u32 %v1723, 4294901760
        %2104 = vmatmul.f32.gmra.mxu0 %v2103
        %v2105 = vpop.f32.mrf.mxu0
        %v2106 = vadd.f32 %v2049, %v2105
        %v2107 = vand.u32 %v1726, 4294901760
        %2108 = vmatmul.f32.gmra.mxu0 %v2107
        %v2109 = vpop.f32.mrf.mxu0
        %v2110 = vadd.f32 %v2057, %v2109
        %2111 = vdwg.mxu0
        %2112 = vmatpush.msra.mxu0 0.0
        %2113 = vmatpush.msra.mxu0 0.0
        %2114 = vmatpush.msra.mxu0 0.0
        %2115 = vmatpush.msra.mxu0 0.0
        %2116 = vmatpush.msra.mxu0 0.0
        %2117 = vmatpush.msra.mxu0 0.0
        %2118 = vmatpush.msra.mxu0 0.0
        %2119 = vmatpush.msra.mxu0 0.0
        %2120 = vmatpush.msra.mxu0 0.0
        %2121 = vmatpush.msra.mxu0 0.0
        %2122 = vmatpush.msra.mxu0 0.0
        %2123 = vmatpush.msra.mxu0 0.0
        %v2124 = vand.u32 %v404, 4294901760
        %v2125 = vsub.f32 %v404, %v2124
        %2126 = vmatpush.msra.mxu0 %v2125
        %v2127 = vand.u32 %v402, 4294901760
        %v2128 = vsub.f32 %v402, %v2127
        %2129 = vmatpush.msra.mxu0 %v2128
        %v2130 = vand.u32 %v400, 4294901760
        %v2131 = vsub.f32 %v400, %v2130
        %2132 = vmatpush.msra.mxu0 %v2131
        %v2133 = vand.u32 %v398, 4294901760
        %v2134 = vsub.f32 %v398, %v2133
        %2135 = vmatpush.msra.mxu0 %v2134
        %v2136 = vand.u32 %v1717, 4294901760
        %v2137 = vsub.f32 %v1717, %v2136
        %2138 = vmatmul.f32.gmra.mxu0 %v2137
        %v2139 = vpop.f32.mrf.mxu0
        %v2140 = vadd.f32 %v2098, %v2139
        %v2141 = vand.u32 %v1720, 4294901760
        %v2142 = vsub.f32 %v1720, %v2141
        %2143 = vmatmul.f32.gmra.mxu0 %v2142
        %v2144 = vpop.f32.mrf.mxu0
        %v2145 = vadd.f32 %v2102, %v2144
        %v2146 = vand.u32 %v1723, 4294901760
        %v2147 = vsub.f32 %v1723, %v2146
        %2148 = vmatmul.f32.gmra.mxu0 %v2147
        %v2149 = vpop.f32.mrf.mxu0
        %v2150 = vadd.f32 %v2106, %v2149
        %v2151 = vand.u32 %v1726, 4294901760
        %v2152 = vsub.f32 %v1726, %v2151
        %2153 = vmatmul.f32.gmra.mxu0 %v2152
        %v2154 = vpop.f32.mrf.mxu0
        %v2155 = vadd.f32 %v2110, %v2154
        %2156 = vdwg.mxu0
        %2157 = vmatpush.msra.mxu0 0.0
        %2158 = vmatpush.msra.mxu0 0.0
        %2159 = vmatpush.msra.mxu0 0.0
        %2160 = vmatpush.msra.mxu0 0.0
        %2161 = vmatpush.msra.mxu0 0.0
        %2162 = vmatpush.msra.mxu0 0.0
        %2163 = vmatpush.msra.mxu0 0.0
        %2164 = vmatpush.msra.mxu0 0.0
        %2165 = vmatpush.msra.mxu0 0.0
        %2166 = vmatpush.msra.mxu0 0.0
        %2167 = vmatpush.msra.mxu0 0.0
        %2168 = vmatpush.msra.mxu0 0.0
        %v2169 = vand.u32 %v404, 4294901760
        %2170 = vmatpush.msra.mxu0 %v2169
        %v2171 = vand.u32 %v402, 4294901760
        %2172 = vmatpush.msra.mxu0 %v2171
        %v2173 = vand.u32 %v400, 4294901760
        %2174 = vmatpush.msra.mxu0 %v2173
        %v2175 = vand.u32 %v398, 4294901760
        %2176 = vmatpush.msra.mxu0 %v2175
        %v2177 = vand.u32 %v1717, 4294901760
        %v2178 = vsub.f32 %v1717, %v2177
        %v2179 = vand.u32 %v2178, 4294901760
        %2180 = vmatmul.f32.gmra.mxu0 %v2179
        %v2181 = vpop.f32.mrf.mxu0
        %v2182 = vadd.f32 %v2140, %v2181
        %v2183 = vand.u32 %v1720, 4294901760
        %v2184 = vsub.f32 %v1720, %v2183
        %v2185 = vand.u32 %v2184, 4294901760
        %2186 = vmatmul.f32.gmra.mxu0 %v2185
        %v2187 = vpop.f32.mrf.mxu0
        %v2188 = vadd.f32 %v2145, %v2187
        %v2189 = vand.u32 %v1723, 4294901760
        %v2190 = vsub.f32 %v1723, %v2189
        %v2191 = vand.u32 %v2190, 4294901760
        %2192 = vmatmul.f32.gmra.mxu0 %v2191
        %v2193 = vpop.f32.mrf.mxu0
        %v2194 = vadd.f32 %v2150, %v2193
        %v2195 = vand.u32 %v1726, 4294901760
        %v2196 = vsub.f32 %v1726, %v2195
        %v2197 = vand.u32 %v2196, 4294901760
        %2198 = vmatmul.f32.gmra.mxu0 %v2197
        %v2199 = vpop.f32.mrf.mxu0
        %v2200 = vadd.f32 %v2155, %v2199
        %2201 = vdwg.mxu0
        %2202 = vmatpush.msra.mxu0 0.0
        %2203 = vmatpush.msra.mxu0 0.0
        %2204 = vmatpush.msra.mxu0 0.0
        %2205 = vmatpush.msra.mxu0 0.0
        %2206 = vmatpush.msra.mxu0 0.0
        %2207 = vmatpush.msra.mxu0 0.0
        %2208 = vmatpush.msra.mxu0 0.0
        %2209 = vmatpush.msra.mxu0 0.0
        %2210 = vmatpush.msra.mxu0 0.0
        %2211 = vmatpush.msra.mxu0 0.0
        %2212 = vmatpush.msra.mxu0 0.0
        %2213 = vmatpush.msra.mxu0 0.0
        %v2214 = vand.u32 %v404, 4294901760
        %v2215 = vsub.f32 %v404, %v2214
        %v2216 = vand.u32 %v2215, 4294901760
        %2217 = vmatpush.msra.mxu0 %v2216
        %v2218 = vand.u32 %v402, 4294901760
        %v2219 = vsub.f32 %v402, %v2218
        %v2220 = vand.u32 %v2219, 4294901760
        %2221 = vmatpush.msra.mxu0 %v2220
        %v2222 = vand.u32 %v400, 4294901760
        %v2223 = vsub.f32 %v400, %v2222
        %v2224 = vand.u32 %v2223, 4294901760
        %2225 = vmatpush.msra.mxu0 %v2224
        %v2226 = vand.u32 %v398, 4294901760
        %v2227 = vsub.f32 %v398, %v2226
        %v2228 = vand.u32 %v2227, 4294901760
        %2229 = vmatpush.msra.mxu0 %v2228
        %v2230 = vand.u32 %v1717, 4294901760
        %2231 = vmatmul.f32.gmra.mxu0 %v2230
        %v2232 = vpop.f32.mrf.mxu0
        %v2233 = vadd.f32 %v2182, %v2232
        %v2234 = vand.u32 %v1720, 4294901760
        %2235 = vmatmul.f32.gmra.mxu0 %v2234
        %v2236 = vpop.f32.mrf.mxu0
        %v2237 = vadd.f32 %v2188, %v2236
        %v2238 = vand.u32 %v1723, 4294901760
        %2239 = vmatmul.f32.gmra.mxu0 %v2238
        %v2240 = vpop.f32.mrf.mxu0
        %v2241 = vadd.f32 %v2194, %v2240
        %v2242 = vand.u32 %v1726, 4294901760
        %2243 = vmatmul.f32.gmra.mxu0 %v2242
        %v2244 = vpop.f32.mrf.mxu0
        %v2245 = vadd.f32 %v2200, %v2244
        %2246 = vdwg.mxu0
        %2247 = vmatpush.msra.mxu0 0.0
        %2248 = vmatpush.msra.mxu0 0.0
        %2249 = vmatpush.msra.mxu0 0.0
        %2250 = vmatpush.msra.mxu0 0.0
        %2251 = vmatpush.msra.mxu0 0.0
        %2252 = vmatpush.msra.mxu0 0.0
        %2253 = vmatpush.msra.mxu0 0.0
        %2254 = vmatpush.msra.mxu0 0.0
        %2255 = vmatpush.msra.mxu0 0.0
        %2256 = vmatpush.msra.mxu0 0.0
        %2257 = vmatpush.msra.mxu0 0.0
        %2258 = vmatpush.msra.mxu0 0.0
        %v2259 = vand.u32 %v404, 4294901760
        %2260 = vmatpush.msra.mxu0 %v2259
        %v2261 = vand.u32 %v402, 4294901760
        %2262 = vmatpush.msra.mxu0 %v2261
        %v2263 = vand.u32 %v400, 4294901760
        %2264 = vmatpush.msra.mxu0 %v2263
        %v2265 = vand.u32 %v398, 4294901760
        %2266 = vmatpush.msra.mxu0 %v2265
        %v2267 = vand.u32 %v1717, 4294901760
        %2268 = vmatmul.f32.gmra.mxu0 %v2267
        %v2269 = vpop.f32.mrf.mxu0
        %v2270 = vadd.f32 %v2233, %v2269
        %v2271 = vand.u32 %v1720, 4294901760
        %2272 = vmatmul.f32.gmra.mxu0 %v2271
        %v2273 = vpop.f32.mrf.mxu0
        %v2274 = vadd.f32 %v2237, %v2273
        %v2275 = vand.u32 %v1723, 4294901760
        %2276 = vmatmul.f32.gmra.mxu0 %v2275
        %v2277 = vpop.f32.mrf.mxu0
        %v2278 = vadd.f32 %v2241, %v2277
        %v2279 = vand.u32 %v1726, 4294901760
        %2280 = vmatmul.f32.gmra.mxu0 %v2279
        %v2281 = vpop.f32.mrf.mxu0
        %v2282 = vadd.f32 %v2245, %v2281
        %2283 = vdwg.mxu0
        %2284 = vst [vmem:[%s344] sm:$0xff] %v1992
        %2285 = vst [vmem:[%s344 + $0x8] sm:$0xff] %v2270
        %2286 = vst [vmem:[%s344 + $0x10] sm:$0xff] %v1996
        %2287 = vst [vmem:[%s344 + $0x18] sm:$0xff] %v2274
        %2288 = vst [vmem:[%s344 + $0x20] sm:$0xff] %v2000
        %2289 = vst [vmem:[%s344 + $0x28] sm:$0xff] %v2278
        %2290 = vst [vmem:[%s344 + $0x30] sm:$0xff] %v2004
        %2291 = vst [vmem:[%s344 + $0x38] sm:$0xff] %v2282
        %p2292 = scmp.lt.s32.totalorder %s25, 7
        %s2293 = scalar_select %p2292, %s25, 7
        %s2294 = smul.addr %s2293, 32
        %s2295 = smul.addr %s2294, 8
        %s2296 = scalar_lea.vmem %s6, %s2295
        %s2297 = sand.u32 %s205, 1
        %s2298 = scalar_lea.sflag [#allocation4], %s2297
        %s2299 = sand.u32 %s205, 1
        %s2300 = smul.addr %s2299, 64
        %s2301 = scalar_lea.vmem [#allocation5], %s2300
        // Predicated region
        $region49: #{tpu_custom_call.1} parent=43 // pred_check
          %p2302 = pneg %p189
        $region50: #{tpu_custom_call.1} parent=43 // pred_check_branch
          %2304 = sbr.rel (%p2302) target = $region52
        $region51: #{tpu_custom_call.1} parent=43 // pred_region
          _
        $region52: #{tpu_custom_call.1} parent=43 // pred_fallthru
          _
        // Predicated region
        $region53: #{tpu_custom_call.1} parent=43 // pred_check
          %p2305 = pneg %p215
        $region54: #{tpu_custom_call.1} parent=43 // pred_check_branch
          %2307 = sbr.rel (%p2305) target = $region56
        $region55: #{tpu_custom_call.1} parent=43 // pred_region
          %2309 = vsyncadd %s2298, 0
          %s2310 = smul.addr %s25, 8
          %s2311 = smul.addr %s2310, 8
          %s2312 = scalar_lea.hbm %s7, %s2311
          %s2313 = sshll.u32 %s2301, 4
          %s2314 = int_to_ptr.vmem [resolvable:$true] %s2313
          %s2315 = sshll.u32 %s2312, 4
          %s2316 = int_to_ptr.hbm [resolvable:$true] %s2315
          %2321 = dma.vmem_to_hbm [thread:$0]  %s2314, 1024, %s2316, %s2298, 256, 256, 16
        $region56: #{tpu_custom_call.1} parent=43 // pred_fallthru
          _
      $region44: #{tpu_custom_call.1} parent=5 // pred_fallthru
        _
      %p2322 = scmp.le.s32.totalorder 2, %s20
      // Predicated region
      $region57: #{tpu_custom_call.1} parent=5 // pred_check
        %p2323 = pneg %p2322
      $region58: #{tpu_custom_call.1} parent=5 // pred_check_branch
        %2325 = sbr.rel (%p2323) target = $region60
      $region59: #{tpu_custom_call.1} parent=5 // pred_region
        %s2326 = ssub.s32 %s20, 2
        // Predicated region
        $region61: #{tpu_custom_call.1} parent=59 // pred_check
          %p2327 = pneg %p195
        $region62: #{tpu_custom_call.1} parent=59 // pred_check_branch
          %2329 = sbr.rel (%p2327) target = $region64
        $region63: #{tpu_custom_call.1} parent=59 // pred_region
          %p2330 = scmp.lt.s32.totalorder %s26, 7
          %s2331 = scalar_select %p2330, %s26, 7
          %s2332 = smul.addr %s2331, 32
          %s2333 = smul.addr %s2332, 8
          %s2334 = scalar_lea.vmem %s6, %s2333
        $region64: #{tpu_custom_call.1} parent=59 // pred_fallthru
          _
        // Predicated region
        $region65: #{tpu_custom_call.1} parent=59 // pred_check
          %p2335 = pneg %p221
        $region66: #{tpu_custom_call.1} parent=59 // pred_check_branch
          %2337 = sbr.rel (%p2335) target = $region68
        $region67: #{tpu_custom_call.1} parent=59 // pred_region
          %s2338 = sand.u32 %s206, 1
          %s2339 = scalar_lea.sflag [#allocation4], %s2338
          %s2340 = sand.u32 %s206, 1
          %s2341 = smul.addr %s2340, 64
          %s2342 = scalar_lea.vmem [#allocation5], %s2341
          %2344 = dma.done %s2339, 1024
        $region68: #{tpu_custom_call.1} parent=59 // pred_fallthru
          _
      $region60: #{tpu_custom_call.1} parent=5 // pred_fallthru
        _
    $region6: #{tpu_custom_call.1} parent=1 // loop_footer
      %s24 = sadd.s32 1, %s20
    $region7: #{tpu_custom_call.1} parent=1 // loop_footer_branch
      %19 = sbr.rel target = $region3
    $region8: #{tpu_custom_call.1} parent=1 // loop_exit
      _
    %2345 = vsyncpa [#allocation3], 1
    %s2346 = scalar_lea.sflag [#allocation3], 1
    %2347 = vsyncpa %s2346, 1
    %2348 = vsyncpa [#allocation4], 1
    %s2349 = scalar_lea.sflag [#allocation4], 1
    %2350 = vsyncpa %s2349, 1

</llo_original>
